<compile_context>
chip_gen: v7x
topology: tpu7x:2x2x1
jax: 0.10.0
libtpu: 0.0.40
codegen_flags: <defaults>
</compile_context>

<pallas_src>
import functools

import jax
import jax.numpy as jnp
from jax import lax
from jax.experimental import pallas as pl
from jax.experimental.pallas import tpu as pltpu


# ---------------------------------------------------------------------------
# Fused kernel: projections + linear attention + output projection.
# Layout inside the kernel is channels-first: every activation slab is
# (channels, n) with n = H*W on the lane axis (lane-dense, 256-wide MXU N).
# ---------------------------------------------------------------------------
def _linear_cross_attn_kernel(x_ref, c_ref, wq_ref, wkv_ref, wo_ref, bo_ref,
                              mask_ref, o_ref, *, batch_block, hidden):
    mask_scaled = mask_ref[...]          # (hidden, hidden) f32: block-diag * scale
    bo = bo_ref[...]                     # (dim, 1) f32
    wq = wq_ref[...]                     # (hidden, dim)      bf16
    wkv = wkv_ref[...]                   # (2*hidden, cin)    bf16
    wo = wo_ref[...]                     # (dim, hidden)      bf16

    for i in range(batch_block):         # static unroll over the batch block
        x = x_ref[i].astype(jnp.bfloat16)     # (dim, n)
        ctx = c_ref[i].astype(jnp.bfloat16)   # (cin, n)

        # 1x1 convs == channel matmuls on the MXU.
        q = jnp.dot(wq, x, preferred_element_type=jnp.float32)        # (hidden, n)
        kv = jnp.dot(wkv, ctx, preferred_element_type=jnp.float32)    # (2*hidden, n)
        k = kv[:hidden]                                                # f32
        v = kv[hidden:].astype(jnp.bfloat16)

        # PyTorch k.softmax(dim=-1) == softmax over spatial positions (lane axis
        # here).  Normalization is deferred to the Gram rows (exact math).
        k = k - jnp.max(k, axis=-1, keepdims=True)
        ek = jnp.exp(k)                                                # f32 (hidden, n)
        denom = jnp.sum(ek, axis=-1, keepdims=True)                    # (hidden, 1)
        inv_den = pl.reciprocal(denom, approx=True)                    # EUP, ~free

        # gram[d, e] = sum_n softmax(k)[d, n] * v[e, n], masked to its per-head
        # block diagonal; mask_scaled also carries q's 1/sqrt(dim_head) scale.
        gram = lax.dot_general(ek.astype(jnp.bfloat16), v,
                               (((1,), (1,)), ((), ())),
                               preferred_element_type=jnp.float32)     # (d, e)
        gram = gram * mask_scaled * inv_den

        # out[e, n] = sum_d gram[d, e] * q[d, n]
        out = lax.dot_general(gram.astype(jnp.bfloat16),
                              q.astype(jnp.bfloat16),
                              (((0,), (0,)), ((), ())),
                              preferred_element_type=jnp.float32)      # (hidden, n)

        # to_out 1x1 conv + bias.
        y = jnp.dot(wo, out.astype(jnp.bfloat16),
                    preferred_element_type=jnp.float32) + bo           # (dim, n)
        o_ref[i] = y.astype(o_ref.dtype)


# ---------------------------------------------------------------------------
# Wrapper: NCHW (PyTorch convention) in/out.  Only free reshapes — no transposes.
# Weight layouts are the squeezed PyTorch conv layouts:
#   wq: (hidden, dim), wk/wv: (hidden, context_in), wo: (dim, hidden), bo: (dim,)
# ---------------------------------------------------------------------------
@functools.partial(jax.jit, static_argnames=("heads", "dim_head", "batch_block"))
def linear_cross_attention(x, context, wq, wk, wv, wo, bo, *,
                           heads, dim_head, batch_block=1):
    B, dim, H, W = x.shape
    cin = context.shape[1]
    hidden = heads * dim_head
    n = H * W
    scale = float(dim_head) ** -0.5

    # Static shape checks (kernel assumes lane/sublane friendly sizes).
    assert wq.shape == (hidden, dim) and wk.shape == (hidden, cin)
    assert wv.shape == (hidden, cin) and wo.shape == (dim, hidden)
    assert bo.shape == (dim,)
    assert dim % 128 == 0 and cin % 128 == 0 and hidden % 128 == 0, \
        "channel dims must be multiples of 128 for lane-dense tiles"
    assert n % 128 == 0, "H*W must be a multiple of 128"
    assert B % batch_block == 0, "batch must divide batch_block"

    # Channels-first (C, n) slabs: pure reshapes, zero HBM cost.
    x_cn = x.reshape(B, dim, n)
    c_cn = context.reshape(B, cin, n)

    # bf16 weights, fused k|v projection, pre-scaled per-head block-diag mask.
    wq_bf = wq.astype(jnp.bfloat16)
    wkv_bf = jnp.concatenate([wk, wv], axis=0).astype(jnp.bfloat16)
    wo_bf = wo.astype(jnp.bfloat16)
    bo2 = bo.reshape(dim, 1).astype(jnp.float32)
    head_id = jnp.arange(hidden, dtype=jnp.int32) // dim_head
    mask_scaled = (head_id[:, None] == head_id[None, :]).astype(jnp.float32) * scale

    kernel = functools.partial(_linear_cross_attn_kernel,
                               batch_block=batch_block, hidden=hidden)

    # VMEM budget: raise the scoped limit only when big spatial sizes need it.
    act_bytes = 4 * batch_block * n * (dim + cin + dim)          # x + ctx + y blocks
    wgt_bytes = 2 * (hidden * dim + 2 * hidden * cin + dim * hidden) + 4 * hidden * hidden
    itm_bytes = 4 * batch_block * n * (3 * hidden + 2 * hidden)  # q, kv, exp(k), out
    est = 2 * act_bytes + 2 * wgt_bytes + itm_bytes              # double-buffered blocks
    vmem_limit = None
    if est > 12 * 1024 * 1024:
        vmem_limit = min(int(est * 2), 100 * 1024 * 1024)

    grid = (B // batch_block,)
    y_cn = pl.pallas_call(
        kernel,
        out_shape=jax.ShapeDtypeStruct((B, dim, n), x.dtype),
        grid=grid,
        in_specs=[
            pl.BlockSpec((batch_block, dim, n), lambda b: (b, 0, 0)),
            pl.BlockSpec((batch_block, cin, n), lambda b: (b, 0, 0)),
            pl.BlockSpec((hidden, dim), lambda b: (0, 0)),
            pl.BlockSpec((2 * hidden, cin), lambda b: (0, 0)),
            pl.BlockSpec((dim, hidden), lambda b: (0, 0)),
            pl.BlockSpec((dim, 1), lambda b: (0, 0)),
            pl.BlockSpec((hidden, hidden), lambda b: (0, 0)),
        ],
        out_specs=pl.BlockSpec((batch_block, dim, n), lambda b: (b, 0, 0)),
        # "parallel" lets megacore chips shard the batch axis; on single-TC
        # chips pass batch_block=B to amortize per-step grid overhead instead.
        compiler_params=pltpu.CompilerParams(
            dimension_semantics=("parallel",),
            vmem_limit_bytes=vmem_limit),
    )(x_cn, c_cn, wq_bf, wkv_bf, wo_bf, bo2, mask_scaled)

    return y_cn.reshape(B, dim, H, W)


# ---------------------------------------------------------------------------
# Pure-JAX reference mirroring the PyTorch einsum path (for verification).
# ---------------------------------------------------------------------------
def linear_cross_attention_ref(x, context, wq, wk, wv, wo, bo, heads, dim_head):
    B, dim, H, W = x.shape
    hidden = heads * dim_head
    scale = dim_head ** (-0.5)

    q = jnp.einsum("oi,bihw->bohw", wq, x)
    k = jnp.einsum("oi,bihw->bohw", wk, context)
    v = jnp.einsum("oi,bihw->bohw", wv, context)

    def split(t):  # 'b (h c) x y -> b h c (x y)'
        return t.reshape(B, heads, dim_head, H * W)

    q, k, v = split(q) * scale, split(k), split(v)
    k = jax.nn.softmax(k, axis=-1)
    ctx = jnp.einsum("bhdn,bhen->bhde", k, v)
    out = jnp.einsum("bhde,bhdn->bhen", ctx, q)
    out = out.reshape(B, hidden, H, W)        # 'b h c (x y) -> b (h c) x y'
    return jnp.einsum("oi,bihw->bohw", wo, out) + bo.reshape(1, dim, 1, 1)


if __name__ == "__main__":
    key = jax.random.PRNGKey(0)
    B, dim, context_in = 2, 128, 128
    heads, dim_head = 4, 32          # hidden_dim = 128 (module defaults)
    H = W = 16
    hidden = heads * dim_head

    kx, kc, k1, k2, k3, k4, k5 = jax.random.split(key, 7)
    x = jax.random.normal(kx, (B, dim, H, W), jnp.float32)
    context = jax.random.normal(kc, (B, context_in, H, W), jnp.float32)
    wq = jax.random.normal(k1, (hidden, dim), jnp.float32) / jnp.sqrt(dim)
    wk = jax.random.normal(k2, (hidden, context_in), jnp.float32) / jnp.sqrt(context_in)
    wv = jax.random.normal(k3, (hidden, context_in), jnp.float32) / jnp.sqrt(context_in)
    wo = jax.random.normal(k4, (dim, hidden), jnp.float32) / jnp.sqrt(hidden)
    bo = 0.1 * jax.random.normal(k5, (dim,), jnp.float32)

    y_ref = linear_cross_attention_ref(x, context, wq, wk, wv, wo, bo,
                                       heads, dim_head)

    # bf16 MXU operands -> loosened tolerance (softmax & accumulation stay f32).
    atol, rtol = 3e-2, 3e-2
    for bt in (1, 2):   # single batch element per step, and whole batch per step
        y = linear_cross_attention(x, context, wq, wk, wv, wo, bo,
                                   heads=heads, dim_head=dim_head,
                                   batch_block=bt)
        jax.block_until_ready(y)
        assert y.shape == (B, dim, H, W)
        err = float(jnp.max(jnp.abs(y - y_ref)))
        ok = bool(jnp.all(jnp.abs(y - y_ref) <= atol + rtol * jnp.abs(y_ref)))
        assert ok, f"batch_block={bt}: max abs err vs reference = {err}"

    # TODO(synk): the PyTorch forward accepts a `mask` argument but never uses
    # it; it is intentionally omitted here.
    print("KERNEL_OK")
</pallas_src>

<mosaic_0001>
module attributes {stable_mosaic.version = 11 : i64} {
  func.func @_linear_cross_attn_kernel(%arg0: i32, %arg1: memref<1x128x256xf32, #tpu.memory_space<vmem>>, %arg2: memref<1x128x256xf32, #tpu.memory_space<vmem>>, %arg3: memref<128x128xbf16, #tpu.memory_space<vmem>>, %arg4: memref<256x128xbf16, #tpu.memory_space<vmem>>, %arg5: memref<128x128xbf16, #tpu.memory_space<vmem>>, %arg6: memref<128x1xf32, #tpu.memory_space<vmem>>, %arg7: memref<128x128xf32, #tpu.memory_space<vmem>>, %arg8: memref<1x128x256xf32, #tpu.memory_space<vmem>>) attributes {dimension_semantics = [#tpu.dimension_semantics<parallel>], iteration_bounds = array<i64: 2>, scalar_prefetch = 0 : i64, scratch_operands = 0 : i64, tpu.core_type = #tpu.core_type<tc>, window_params = [{transform_indices = @transform_0, window_bounds = array<i64: 1, 128, 256>}, {transform_indices = @transform_1, window_bounds = array<i64: 1, 128, 256>}, {pipeline_mode = #tpu.pipeline_mode<synchronous>, transform_indices = @transform_2, window_bounds = array<i64: 128, 128>}, {pipeline_mode = #tpu.pipeline_mode<synchronous>, transform_indices = @transform_3, window_bounds = array<i64: 256, 128>}, {pipeline_mode = #tpu.pipeline_mode<synchronous>, transform_indices = @transform_4, window_bounds = array<i64: 128, 128>}, {pipeline_mode = #tpu.pipeline_mode<synchronous>, transform_indices = @transform_5, window_bounds = array<i64: 128, 1>}, {pipeline_mode = #tpu.pipeline_mode<synchronous>, transform_indices = @transform_6, window_bounds = array<i64: 128, 128>}, {transform_indices = @transform_7, window_bounds = array<i64: 1, 128, 256>}]} {
    %c0 = arith.constant 0 : index
    %c0_0 = arith.constant 0 : index
    %0 = vector.load %arg7[%c0, %c0_0] : memref<128x128xf32, #tpu.memory_space<vmem>>, vector<128x128xf32>
    %c0_1 = arith.constant 0 : index
    %c0_2 = arith.constant 0 : index
    %1 = vector.load %arg6[%c0_1, %c0_2] : memref<128x1xf32, #tpu.memory_space<vmem>>, vector<128x1xf32>
    %c0_3 = arith.constant 0 : index
    %c0_4 = arith.constant 0 : index
    %2 = vector.load %arg3[%c0_3, %c0_4] : memref<128x128xbf16, #tpu.memory_space<vmem>>, vector<128x128xbf16>
    %c0_5 = arith.constant 0 : index
    %c0_6 = arith.constant 0 : index
    %3 = vector.load %arg4[%c0_5, %c0_6] : memref<256x128xbf16, #tpu.memory_space<vmem>>, vector<256x128xbf16>
    %c0_7 = arith.constant 0 : index
    %c0_8 = arith.constant 0 : index
    %4 = vector.load %arg5[%c0_7, %c0_8] : memref<128x128xbf16, #tpu.memory_space<vmem>>, vector<128x128xbf16>
    %c0_9 = arith.constant 0 : index
    %c0_10 = arith.constant 0 : index
    %c0_11 = arith.constant 0 : index
    %5 = vector.load %arg1[%c0_9, %c0_10, %c0_11] : memref<1x128x256xf32, #tpu.memory_space<vmem>>, vector<1x128x256xf32>
    %6 = vector.shape_cast %5 : vector<1x128x256xf32> to vector<128x256xf32>
    %7 = arith.truncf %6 : vector<128x256xf32> to vector<128x256xbf16>
    %c0_12 = arith.constant 0 : index
    %c0_13 = arith.constant 0 : index
    %c0_14 = arith.constant 0 : index
    %8 = vector.load %arg2[%c0_12, %c0_13, %c0_14] : memref<1x128x256xf32, #tpu.memory_space<vmem>>, vector<1x128x256xf32>
    %9 = vector.shape_cast %8 : vector<1x128x256xf32> to vector<128x256xf32>
    %10 = arith.truncf %9 : vector<128x256xf32> to vector<128x256xbf16>
    %cst = arith.constant dense<0.000000e+00> : vector<128x256xf32>
    %11 = tpu.matmul %2, %7, %cst {dimension_numbers = #tpu.dot_dimension_numbers<[1], [0], [0], [1], [0, 0, 1, 1], [], []>} : vector<128x128xbf16>, vector<128x256xbf16>, vector<128x256xf32> -> vector<128x256xf32>
    %cst_15 = arith.constant dense<0.000000e+00> : vector<256x256xf32>
    %12 = tpu.matmul %3, %10, %cst_15 {dimension_numbers = #tpu.dot_dimension_numbers<[1], [0], [0], [1], [0, 0, 1, 1], [], []>} : vector<256x128xbf16>, vector<128x256xbf16>, vector<256x256xf32> -> vector<256x256xf32>
    %13 = vector.extract_strided_slice %12 {offsets = [0, 0], sizes = [128, 256], strides = [1, 1]} : vector<256x256xf32> to vector<128x256xf32>
    %14 = vector.extract_strided_slice %12 {offsets = [128, 0], sizes = [128, 256], strides = [1, 1]} : vector<256x256xf32> to vector<128x256xf32>
    %15 = arith.truncf %14 : vector<128x256xf32> to vector<128x256xbf16>
    %cst_16 = arith.constant dense<0xFF800000> : vector<128xf32>
    %16 = vector.multi_reduction <maximumf>, %13, %cst_16 [1] : vector<128x256xf32> to vector<128xf32>
    %17 = vector.shape_cast %16 : vector<128xf32> to vector<128x1xf32>
    %18 = vector.broadcast %17 : vector<128x1xf32> to vector<128x256xf32>
    %19 = arith.subf %13, %18 : vector<128x256xf32>
    %20 = math.exp %19 : vector<128x256xf32>
    %cst_17 = arith.constant dense<0.000000e+00> : vector<128xf32>
    %21 = vector.multi_reduction <add>, %20, %cst_17 [1] : vector<128x256xf32> to vector<128xf32>
    %22 = vector.shape_cast %21 : vector<128xf32> to vector<128x1xf32>
    %23 = tpu.reciprocal %22 {approx = true} : vector<128x1xf32> -> vector<128x1xf32>
    %24 = arith.truncf %20 : vector<128x256xf32> to vector<128x256xbf16>
    %cst_18 = arith.constant dense<0.000000e+00> : vector<128x128xf32>
    %25 = tpu.matmul %24, %15, %cst_18 {dimension_numbers = #tpu.dot_dimension_numbers<[1], [1], [0], [0], [0, 0, 1, 0], [], []>} : vector<128x256xbf16>, vector<128x256xbf16>, vector<128x128xf32> -> vector<128x128xf32>
    %26 = arith.mulf %25, %0 : vector<128x128xf32>
    %27 = vector.broadcast %23 : vector<128x1xf32> to vector<128x128xf32>
    %28 = arith.mulf %26, %27 : vector<128x128xf32>
    %29 = arith.truncf %28 : vector<128x128xf32> to vector<128x128xbf16>
    %30 = arith.truncf %11 : vector<128x256xf32> to vector<128x256xbf16>
    %cst_19 = arith.constant dense<0.000000e+00> : vector<128x256xf32>
    %31 = tpu.matmul %29, %30, %cst_19 {dimension_numbers = #tpu.dot_dimension_numbers<[0], [0], [1], [1], [0, 1, 1, 1], [], []>} : vector<128x128xbf16>, vector<128x256xbf16>, vector<128x256xf32> -> vector<128x256xf32>
    %32 = arith.truncf %31 : vector<128x256xf32> to vector<128x256xbf16>
    %cst_20 = arith.constant dense<0.000000e+00> : vector<128x256xf32>
    %33 = tpu.matmul %4, %32, %cst_20 {dimension_numbers = #tpu.dot_dimension_numbers<[1], [0], [0], [1], [0, 0, 1, 1], [], []>} : vector<128x128xbf16>, vector<128x256xbf16>, vector<128x256xf32> -> vector<128x256xf32>
    %34 = vector.broadcast %1 : vector<128x1xf32> to vector<128x256xf32>
    %35 = arith.addf %33, %34 : vector<128x256xf32>
    %c0_21 = arith.constant 0 : index
    %c0_22 = arith.constant 0 : index
    %c0_23 = arith.constant 0 : index
    %36 = vector.load %arg8[%c0_21, %c0_22, %c0_23] : memref<1x128x256xf32, #tpu.memory_space<vmem>>, vector<1x128x256xf32>
    %37 = vector.shape_cast %36 : vector<1x128x256xf32> to vector<128x256xf32>
    %38 = vector.shape_cast %35 : vector<128x256xf32> to vector<1x128x256xf32>
    tpu.vector_store %arg8[%c0_21, %c0_22, %c0_23], %38 {strides = array<i32>} : memref<1x128x256xf32, #tpu.memory_space<vmem>>, vector<1x128x256xf32>,
    return
  }
  func.func @transform_0(%arg0: i32) -> (i32, i32, i32) {
    %c0_i32 = arith.constant 0 : i32
    %c0_i32_0 = arith.constant 0 : i32
    %c0_i32_1 = arith.constant 0 : i32
    return %arg0, %c0_i32, %c0_i32_0 : i32, i32, i32
  }
  func.func @transform_1(%arg0: i32) -> (i32, i32, i32) {
    %c0_i32 = arith.constant 0 : i32
    %c0_i32_0 = arith.constant 0 : i32
    %c0_i32_1 = arith.constant 0 : i32
    return %arg0, %c0_i32, %c0_i32_0 : i32, i32, i32
  }
  func.func @transform_2(%arg0: i32) -> (i32, i32) {
    %c0_i32 = arith.constant 0 : i32
    %c0_i32_0 = arith.constant 0 : i32
    %c0_i32_1 = arith.constant 0 : i32
    return %c0_i32, %c0_i32_0 : i32, i32
  }
  func.func @transform_3(%arg0: i32) -> (i32, i32) {
    %c0_i32 = arith.constant 0 : i32
    %c0_i32_0 = arith.constant 0 : i32
    %c0_i32_1 = arith.constant 0 : i32
    return %c0_i32, %c0_i32_0 : i32, i32
  }
  func.func @transform_4(%arg0: i32) -> (i32, i32) {
    %c0_i32 = arith.constant 0 : i32
    %c0_i32_0 = arith.constant 0 : i32
    %c0_i32_1 = arith.constant 0 : i32
    return %c0_i32, %c0_i32_0 : i32, i32
  }
  func.func @transform_5(%arg0: i32) -> (i32, i32) {
    %c0_i32 = arith.constant 0 : i32
    %c0_i32_0 = arith.constant 0 : i32
    %c0_i32_1 = arith.constant 0 : i32
    return %c0_i32, %c0_i32_0 : i32, i32
  }
  func.func @transform_6(%arg0: i32) -> (i32, i32) {
    %c0_i32 = arith.constant 0 : i32
    %c0_i32_0 = arith.constant 0 : i32
    %c0_i32_1 = arith.constant 0 : i32
    return %c0_i32, %c0_i32_0 : i32, i32
  }
  func.func @transform_7(%arg0: i32) -> (i32, i32, i32) {
    %c0_i32 = arith.constant 0 : i32
    %c0_i32_0 = arith.constant 0 : i32
    %c0_i32_1 = arith.constant 0 : i32
    return %arg0, %c0_i32, %c0_i32_0 : i32, i32, i32
  }
}

</mosaic_0001>

<llo_original>
// kernel: linear_cross_attention.1
$region0: #{linear_cross_attention.1}
  #allocation0 [shape = 'u32[]', space=smem, size = 0x4, offset = 0x4, fixed_abs, tag = 'smem constant byte address 0x4 - core index']
  #allocation1 [shape = 'u32[144,128]{1,0:T(1,128)}', space=vmem, size = 0x12000, scoped, tag = 'internal scratch']
  %s0 = inlined_call_operand.vmem [shape: f32[2,128,256], index: 0, kind: input, shape index: {}]
  %s1 = inlined_call_operand.vmem [shape: f32[2,128,256], index: 1, kind: input, shape index: {}]
  %s2 = inlined_call_operand.vmem [shape: bf16[128,128], index: 2, kind: input, shape index: {}]
  %s3 = inlined_call_operand.vmem [shape: bf16[256,128], index: 3, kind: input, shape index: {}]
  %s4 = inlined_call_operand.vmem [shape: bf16[128,128], index: 4, kind: input, shape index: {}]
  %s5 = inlined_call_operand.vmem [shape: f32[128,1], index: 5, kind: input, shape index: {}]
  %s6 = inlined_call_operand.vmem [shape: f32[128,128], index: 6, kind: input, shape index: {}]
  %s7 = inlined_call_operand.vmem [shape: f32[2,128,256], index: 7, kind: output, shape index: {}]
  %s8 = sld [smem:[#allocation0]]
  $region61: #{linear_cross_attention.1} parent=0
    _
  %s10 = ssub.s32 1, %s8
  %s11 = scalar_select 0, %s10, %s8
  loop: start=0, step=1, limit=4
  $region2: #{linear_cross_attention.1} parent=0 // loop_pre_header
    _
  $region3: #{linear_cross_attention.1} parent=0 // loop_header
    %s13 = sphi 0, %s17
    %p14 = scmp.ge.s32.totalorder %s13, 4
    %s23 = sphi 0, %s25
    %s26 = sphi 0, %s23
    %s27 = sphi 0, %s26
    %s43 = sphi 0, %s27
    %s49 = sphi 0, %s51
    %s52 = sphi 0, %s49
    %s53 = sphi 0, %s52
    %s69 = sphi 0, %s53
    %s73 = sphi 0, %s73
    %s75 = sphi 0, %s73
    %s76 = sphi 0, %s75
    %s90 = sphi 0, %s76
    %s94 = sphi 0, %s94
    %s96 = sphi 0, %s94
    %s97 = sphi 0, %s96
    %s111 = sphi 0, %s97
    %s115 = sphi 0, %s115
    %s117 = sphi 0, %s115
    %s118 = sphi 0, %s117
    %s132 = sphi 0, %s118
    %s136 = sphi 0, %s136
    %s138 = sphi 0, %s136
    %s139 = sphi 0, %s138
    %s153 = sphi 0, %s139
    %s157 = sphi 0, %s157
    %s159 = sphi 0, %s157
    %s160 = sphi 0, %s159
    %s174 = sphi 0, %s160
    %s180 = sphi 0, %s182
    %s183 = sphi 0, %s180
    %s184 = sphi 0, %s183
    %s200 = sphi 0, %s184
  $region4: #{linear_cross_attention.1} parent=0 // loop_header_branch
    %16 = sbr.rel (%p14) target = $region8
  $region5: #{linear_cross_attention.1} parent=0 // loop_body
    %s18 = ssub.s32 %s13, 1
    %s19 = ssub.s32 %s13, 2
    %s20 = sadd.s32 %s13, 1
    %s21 = ssub.s32 %s13, %s20
    %p22 = scmp.eq.s32.totalorder %s21, 0
    %s24 = sadd.s32 %s23, 1
    %s25 = scalar_select %p22, %s23, %s24
    %p28 = pneg %p22
    %p29 = scmp.eq.s32.totalorder %s13, 1
    %p30 = por %p28, %p29
    %p31 = scmp.ne.s32.totalorder %s23, %s26
    %p32 = scmp.eq.s32.totalorder %s13, 0
    %p33 = por %p31, %p32
    %p34 = scmp.ne.s32.totalorder %s23, %s26
    %p35 = scmp.eq.s32.totalorder %s18, 1
    %p36 = por %p34, %p35
    %p37 = scmp.ne.s32.totalorder %s26, %s27
    %p38 = scmp.eq.s32.totalorder %s18, 0
    %p39 = por %p37, %p38
    %p40 = scmp.ne.s32.totalorder %s26, %s27
    %p41 = scmp.eq.s32.totalorder %s19, 1
    %p42 = por %p40, %p41
    %p44 = scmp.ne.s32.totalorder %s27, %s43
    %p45 = scmp.eq.s32.totalorder %s19, 0
    %p46 = por %p44, %p45
    %s47 = ssub.s32 %s13, %s20
    %p48 = scmp.eq.s32.totalorder %s47, 0
    %s50 = sadd.s32 %s49, 1
    %s51 = scalar_select %p48, %s49, %s50
    %p54 = pneg %p48
    %p55 = scmp.eq.s32.totalorder %s13, 1
    %p56 = por %p54, %p55
    %p57 = scmp.ne.s32.totalorder %s49, %s52
    %p58 = scmp.eq.s32.totalorder %s13, 0
    %p59 = por %p57, %p58
    %p60 = scmp.ne.s32.totalorder %s49, %s52
    %p61 = scmp.eq.s32.totalorder %s18, 1
    %p62 = por %p60, %p61
    %p63 = scmp.ne.s32.totalorder %s52, %s53
    %p64 = scmp.eq.s32.totalorder %s18, 0
    %p65 = por %p63, %p64
    %p66 = scmp.ne.s32.totalorder %s52, %s53
    %p67 = scmp.eq.s32.totalorder %s19, 1
    %p68 = por %p66, %p67
    %p70 = scmp.ne.s32.totalorder %s53, %s69
    %p71 = scmp.eq.s32.totalorder %s19, 0
    %p72 = por %p70, %p71
    %s74 = sadd.s32 %s73, 1
    %p77 = scmp.eq.s32.totalorder %s13, 1
    %p78 = scmp.ne.s32.totalorder %s73, %s75
    %p79 = scmp.eq.s32.totalorder %s13, 0
    %p80 = por %p78, %p79
    %p81 = scmp.ne.s32.totalorder %s73, %s75
    %p82 = scmp.eq.s32.totalorder %s18, 1
    %p83 = por %p81, %p82
    %p84 = scmp.ne.s32.totalorder %s75, %s76
    %p85 = scmp.eq.s32.totalorder %s18, 0
    %p86 = por %p84, %p85
    %p87 = scmp.ne.s32.totalorder %s75, %s76
    %p88 = scmp.eq.s32.totalorder %s19, 1
    %p89 = por %p87, %p88
    %p91 = scmp.ne.s32.totalorder %s76, %s90
    %p92 = scmp.eq.s32.totalorder %s19, 0
    %p93 = por %p91, %p92
    %s95 = sadd.s32 %s94, 1
    %p98 = scmp.eq.s32.totalorder %s13, 1
    %p99 = scmp.ne.s32.totalorder %s94, %s96
    %p100 = scmp.eq.s32.totalorder %s13, 0
    %p101 = por %p99, %p100
    %p102 = scmp.ne.s32.totalorder %s94, %s96
    %p103 = scmp.eq.s32.totalorder %s18, 1
    %p104 = por %p102, %p103
    %p105 = scmp.ne.s32.totalorder %s96, %s97
    %p106 = scmp.eq.s32.totalorder %s18, 0
    %p107 = por %p105, %p106
    %p108 = scmp.ne.s32.totalorder %s96, %s97
    %p109 = scmp.eq.s32.totalorder %s19, 1
    %p110 = por %p108, %p109
    %p112 = scmp.ne.s32.totalorder %s97, %s111
    %p113 = scmp.eq.s32.totalorder %s19, 0
    %p114 = por %p112, %p113
    %s116 = sadd.s32 %s115, 1
    %p119 = scmp.eq.s32.totalorder %s13, 1
    %p120 = scmp.ne.s32.totalorder %s115, %s117
    %p121 = scmp.eq.s32.totalorder %s13, 0
    %p122 = por %p120, %p121
    %p123 = scmp.ne.s32.totalorder %s115, %s117
    %p124 = scmp.eq.s32.totalorder %s18, 1
    %p125 = por %p123, %p124
    %p126 = scmp.ne.s32.totalorder %s117, %s118
    %p127 = scmp.eq.s32.totalorder %s18, 0
    %p128 = por %p126, %p127
    %p129 = scmp.ne.s32.totalorder %s117, %s118
    %p130 = scmp.eq.s32.totalorder %s19, 1
    %p131 = por %p129, %p130
    %p133 = scmp.ne.s32.totalorder %s118, %s132
    %p134 = scmp.eq.s32.totalorder %s19, 0
    %p135 = por %p133, %p134
    %s137 = sadd.s32 %s136, 1
    %p140 = scmp.eq.s32.totalorder %s13, 1
    %p141 = scmp.ne.s32.totalorder %s136, %s138
    %p142 = scmp.eq.s32.totalorder %s13, 0
    %p143 = por %p141, %p142
    %p144 = scmp.ne.s32.totalorder %s136, %s138
    %p145 = scmp.eq.s32.totalorder %s18, 1
    %p146 = por %p144, %p145
    %p147 = scmp.ne.s32.totalorder %s138, %s139
    %p148 = scmp.eq.s32.totalorder %s18, 0
    %p149 = por %p147, %p148
    %p150 = scmp.ne.s32.totalorder %s138, %s139
    %p151 = scmp.eq.s32.totalorder %s19, 1
    %p152 = por %p150, %p151
    %p154 = scmp.ne.s32.totalorder %s139, %s153
    %p155 = scmp.eq.s32.totalorder %s19, 0
    %p156 = por %p154, %p155
    %s158 = sadd.s32 %s157, 1
    %p161 = scmp.eq.s32.totalorder %s13, 1
    %p162 = scmp.ne.s32.totalorder %s157, %s159
    %p163 = scmp.eq.s32.totalorder %s13, 0
    %p164 = por %p162, %p163
    %p165 = scmp.ne.s32.totalorder %s157, %s159
    %p166 = scmp.eq.s32.totalorder %s18, 1
    %p167 = por %p165, %p166
    %p168 = scmp.ne.s32.totalorder %s159, %s160
    %p169 = scmp.eq.s32.totalorder %s18, 0
    %p170 = por %p168, %p169
    %p171 = scmp.ne.s32.totalorder %s159, %s160
    %p172 = scmp.eq.s32.totalorder %s19, 1
    %p173 = por %p171, %p172
    %p175 = scmp.ne.s32.totalorder %s160, %s174
    %p176 = scmp.eq.s32.totalorder %s19, 0
    %p177 = por %p175, %p176
    %s178 = ssub.s32 %s13, %s20
    %p179 = scmp.eq.s32.totalorder %s178, 0
    %s181 = sadd.s32 %s180, 1
    %s182 = scalar_select %p179, %s180, %s181
    %p185 = pneg %p179
    %p186 = scmp.eq.s32.totalorder %s13, 1
    %p187 = por %p185, %p186
    %p188 = scmp.ne.s32.totalorder %s180, %s183
    %p189 = scmp.eq.s32.totalorder %s13, 0
    %p190 = por %p188, %p189
    %p191 = scmp.ne.s32.totalorder %s180, %s183
    %p192 = scmp.eq.s32.totalorder %s18, 1
    %p193 = por %p191, %p192
    %p194 = scmp.ne.s32.totalorder %s183, %s184
    %p195 = scmp.eq.s32.totalorder %s18, 0
    %p196 = por %p194, %p195
    %p197 = scmp.ne.s32.totalorder %s183, %s184
    %p198 = scmp.eq.s32.totalorder %s19, 1
    %p199 = por %p197, %p198
    %p201 = scmp.ne.s32.totalorder %s184, %s200
    %p202 = scmp.eq.s32.totalorder %s19, 0
    %p203 = por %p201, %p202
    %p204 = scmp.le.s32.totalorder 1, %s13
    %p205 = scmp.lt.s32.totalorder %s13, 3
    %p206 = pnand %p204, %p205
    %p207 = pneg %p206
    // Predicated region
    $region9: #{linear_cross_attention.1} parent=5 // pred_check
      _
    $region10: #{linear_cross_attention.1} parent=5 // pred_check_branch
      %209 = sbr.rel (%p206) target = $region12
    $region11: #{linear_cross_attention.1} parent=5 // pred_region
      %s210 = ssub.s32 %s13, 1
      // Predicated region
      $region13: #{linear_cross_attention.1} parent=11 // pred_check
        %p211 = pneg %p86
      $region14: #{linear_cross_attention.1} parent=11 // pred_check_branch
        %213 = sbr.rel (%p211) target = $region16
      $region15: #{linear_cross_attention.1} parent=11 // pred_region
        _
      $region16: #{linear_cross_attention.1} parent=11 // pred_fallthru
        _
      // Predicated region
      $region17: #{linear_cross_attention.1} parent=11 // pred_check
        %p214 = pneg %p107
      $region18: #{linear_cross_attention.1} parent=11 // pred_check_branch
        %216 = sbr.rel (%p214) target = $region20
      $region19: #{linear_cross_attention.1} parent=11 // pred_region
        _
      $region20: #{linear_cross_attention.1} parent=11 // pred_fallthru
        _
      // Predicated region
      $region21: #{linear_cross_attention.1} parent=11 // pred_check
        %p217 = pneg %p128
      $region22: #{linear_cross_attention.1} parent=11 // pred_check_branch
        %219 = sbr.rel (%p217) target = $region24
      $region23: #{linear_cross_attention.1} parent=11 // pred_region
        _
      $region24: #{linear_cross_attention.1} parent=11 // pred_fallthru
        _
      // Predicated region
      $region25: #{linear_cross_attention.1} parent=11 // pred_check
        %p220 = pneg %p149
      $region26: #{linear_cross_attention.1} parent=11 // pred_check_branch
        %222 = sbr.rel (%p220) target = $region28
      $region27: #{linear_cross_attention.1} parent=11 // pred_region
        _
      $region28: #{linear_cross_attention.1} parent=11 // pred_fallthru
        _
      // Predicated region
      $region29: #{linear_cross_attention.1} parent=11 // pred_check
        %p223 = pneg %p170
      $region30: #{linear_cross_attention.1} parent=11 // pred_check_branch
        %225 = sbr.rel (%p223) target = $region32
      $region31: #{linear_cross_attention.1} parent=11 // pred_region
        _
      $region32: #{linear_cross_attention.1} parent=11 // pred_fallthru
        _
    $region12: #{linear_cross_attention.1} parent=5 // pred_fallthru
      _
    %p226 = scmp.lt.s32.totalorder %s13, 2
    // Predicated region
    $region33: #{linear_cross_attention.1} parent=5 // pred_check
      %p227 = pneg %p226
    $region34: #{linear_cross_attention.1} parent=5 // pred_check_branch
      %229 = sbr.rel (%p227) target = $region36
    $region35: #{linear_cross_attention.1} parent=5 // pred_region
      // Predicated region
      $region37: #{linear_cross_attention.1} parent=35 // pred_check
        %p230 = pneg %p33
      $region38: #{linear_cross_attention.1} parent=35 // pred_check_branch
        %232 = sbr.rel (%p230) target = $region40
      $region39: #{linear_cross_attention.1} parent=35 // pred_region
        %p233 = scmp.lt.s32.totalorder %s13, 1
        %s234 = scalar_select %p233, %s13, 1
        %s235 = smul.addr %s234, 32
        %s236 = smul.addr %s235, 8
        %s237 = scalar_lea.vmem %s0, %s236
      $region40: #{linear_cross_attention.1} parent=35 // pred_fallthru
        _
      // Predicated region
      $region41: #{linear_cross_attention.1} parent=35 // pred_check
        %p238 = pneg %p59
      $region42: #{linear_cross_attention.1} parent=35 // pred_check_branch
        %240 = sbr.rel (%p238) target = $region44
      $region43: #{linear_cross_attention.1} parent=35 // pred_region
        %p241 = scmp.lt.s32.totalorder %s13, 1
        %s242 = scalar_select %p241, %s13, 1
        %s243 = smul.addr %s242, 32
        %s244 = smul.addr %s243, 8
        %s245 = scalar_lea.vmem %s1, %s244
      $region44: #{linear_cross_attention.1} parent=35 // pred_fallthru
        _
    $region36: #{linear_cross_attention.1} parent=5 // pred_fallthru
      _
    %p246 = scmp.le.s32.totalorder 1, %s13
    %p247 = scmp.lt.s32.totalorder %s13, 3
    %p248 = pnand %p246, %p247
    %p249 = pneg %p248
    // Predicated region
    $region45: #{linear_cross_attention.1} parent=5 // pred_check
      _
    $region46: #{linear_cross_attention.1} parent=5 // pred_check_branch
      %251 = sbr.rel (%p248) target = $region48
    $region47: #{linear_cross_attention.1} parent=5 // pred_region
      %s252 = ssub.s32 %s13, 1
      %p253 = scmp.lt.s32.totalorder %s18, 1
      %s254 = scalar_select %p253, %s18, 1
      %s255 = smul.addr %s254, 32
      %s256 = smul.addr %s255, 8
      %s257 = scalar_lea.vmem %s0, %s256
      %p258 = pneg %p39
      %p259 = pneg %p36
      %p260 = scmp.lt.s32.totalorder %s18, 1
      %s261 = scalar_select %p260, %s18, 1
      %s262 = smul.addr %s261, 32
      %s263 = smul.addr %s262, 8
      %s264 = scalar_lea.vmem %s1, %s263
      %p265 = pneg %p65
      %p266 = pneg %p62
      %p267 = pneg %p86
      %p268 = pneg %p83
      %p269 = pneg %p107
      %p270 = pneg %p104
      %p271 = pneg %p128
      %p272 = pneg %p125
      %p273 = pneg %p149
      %p274 = pneg %p146
      %p275 = pneg %p170
      %p276 = pneg %p167
      %p277 = pneg %p196
      %p278 = pneg %p193
      %p279 = scmp.lt.s32.totalorder %s18, 1
      %s280 = scalar_select %p279, %s18, 1
      %s281 = smul.addr %s280, 32
      %s282 = smul.addr %s281, 8
      %s283 = scalar_lea.vmem %s7, %s282
      %p284 = scmp.lt.s32.totalorder %s18, 1
      %s285 = scalar_select %p284, %s18, 1
      %s286 = smul.addr %s285, 32
      %s287 = smul.addr %s286, 8
      %s288 = scalar_lea.vmem %s0, %s287
      %p289 = scmp.lt.s32.totalorder %s18, 1
      %s290 = scalar_select %p289, %s18, 1
      %s291 = smul.addr %s290, 32
      %s292 = smul.addr %s291, 8
      %s293 = scalar_lea.vmem %s1, %s292
      %p294 = scmp.lt.s32.totalorder %s18, 1
      %s295 = scalar_select %p294, %s18, 1
      %s296 = smul.addr %s295, 32
      %s297 = smul.addr %s296, 8
      %s298 = scalar_lea.vmem %s7, %s297
      %v300 = vld [vmem:[%s6] sm:$0xff]
      %v301 = vld [vmem:[%s6 + $0x8] sm:$0xff]
      %v302 = vld [vmem:[%s6 + $0x10] sm:$0xff]
      %v303 = vld [vmem:[%s6 + $0x18] sm:$0xff]
      %v304 = vld [vmem:[%s6 + $0x20] sm:$0xff]
      %v305 = vld [vmem:[%s6 + $0x28] sm:$0xff]
      %v306 = vld [vmem:[%s6 + $0x30] sm:$0xff]
      %v307 = vld [vmem:[%s6 + $0x38] sm:$0xff]
      %v308 = vld [vmem:[%s6 + $0x40] sm:$0xff]
      %v309 = vld [vmem:[%s6 + $0x48] sm:$0xff]
      %v310 = vld [vmem:[%s6 + $0x50] sm:$0xff]
      %v311 = vld [vmem:[%s6 + $0x58] sm:$0xff]
      %v312 = vld [vmem:[%s6 + $0x60] sm:$0xff]
      %v313 = vld [vmem:[%s6 + $0x68] sm:$0xff]
      %v314 = vld [vmem:[%s6 + $0x70] sm:$0xff]
      %v315 = vld [vmem:[%s6 + $0x78] sm:$0xff]
      %v316 = vld [vmem:[%s5] sm:$0xff]
      %v317 = vld [vmem:[%s5 + $0x8] sm:$0xff]
      %v318 = vld [vmem:[%s5 + $0x10] sm:$0xff]
      %v319 = vld [vmem:[%s5 + $0x18] sm:$0xff]
      %v320 = vld [vmem:[%s5 + $0x20] sm:$0xff]
      %v321 = vld [vmem:[%s5 + $0x28] sm:$0xff]
      %v322 = vld [vmem:[%s5 + $0x30] sm:$0xff]
      %v323 = vld [vmem:[%s5 + $0x38] sm:$0xff]
      %v324 = vld [vmem:[%s5 + $0x40] sm:$0xff]
      %v325 = vld [vmem:[%s5 + $0x48] sm:$0xff]
      %v326 = vld [vmem:[%s5 + $0x50] sm:$0xff]
      %v327 = vld [vmem:[%s5 + $0x58] sm:$0xff]
      %v328 = vld [vmem:[%s5 + $0x60] sm:$0xff]
      %v329 = vld [vmem:[%s5 + $0x68] sm:$0xff]
      %v330 = vld [vmem:[%s5 + $0x70] sm:$0xff]
      %v331 = vld [vmem:[%s5 + $0x78] sm:$0xff]
      %v332 = vld [vmem:[%s2] sm:$0xf]
      %v333 = vld [vmem:[%s2 + $0x4] sm:$0xf]
      %v334 = vld [vmem:[%s2 + $0x8] sm:$0xf]
      %v335 = vld [vmem:[%s2 + $0xc] sm:$0xf]
      %v336 = vld [vmem:[%s2 + $0x10] sm:$0xf]
      %v337 = vld [vmem:[%s2 + $0x14] sm:$0xf]
      %v338 = vld [vmem:[%s2 + $0x18] sm:$0xf]
      %v339 = vld [vmem:[%s2 + $0x1c] sm:$0xf]
      %v340 = vld [vmem:[%s2 + $0x20] sm:$0xf]
      %v341 = vld [vmem:[%s2 + $0x24] sm:$0xf]
      %v342 = vld [vmem:[%s2 + $0x28] sm:$0xf]
      %v343 = vld [vmem:[%s2 + $0x2c] sm:$0xf]
      %v344 = vld [vmem:[%s2 + $0x30] sm:$0xf]
      %v345 = vld [vmem:[%s2 + $0x34] sm:$0xf]
      %v346 = vld [vmem:[%s2 + $0x38] sm:$0xf]
      %v347 = vld [vmem:[%s2 + $0x3c] sm:$0xf]
      %v348 = vld [vmem:[%s3] sm:$0xf]
      %v349 = vld [vmem:[%s3 + $0x4] sm:$0xf]
      %v350 = vld [vmem:[%s3 + $0x8] sm:$0xf]
      %v351 = vld [vmem:[%s3 + $0xc] sm:$0xf]
      %v352 = vld [vmem:[%s3 + $0x10] sm:$0xf]
      %v353 = vld [vmem:[%s3 + $0x14] sm:$0xf]
      %v354 = vld [vmem:[%s3 + $0x18] sm:$0xf]
      %v355 = vld [vmem:[%s3 + $0x1c] sm:$0xf]
      %v356 = vld [vmem:[%s3 + $0x20] sm:$0xf]
      %v357 = vld [vmem:[%s3 + $0x24] sm:$0xf]
      %v358 = vld [vmem:[%s3 + $0x28] sm:$0xf]
      %v359 = vld [vmem:[%s3 + $0x2c] sm:$0xf]
      %v360 = vld [vmem:[%s3 + $0x30] sm:$0xf]
      %v361 = vld [vmem:[%s3 + $0x34] sm:$0xf]
      %v362 = vld [vmem:[%s3 + $0x38] sm:$0xf]
      %v363 = vld [vmem:[%s3 + $0x3c] sm:$0xf]
      %v364 = vld [vmem:[%s3 + $0x40] sm:$0xf]
      %v365 = vld [vmem:[%s3 + $0x44] sm:$0xf]
      %v366 = vld [vmem:[%s3 + $0x48] sm:$0xf]
      %v367 = vld [vmem:[%s3 + $0x4c] sm:$0xf]
      %v368 = vld [vmem:[%s3 + $0x50] sm:$0xf]
      %v369 = vld [vmem:[%s3 + $0x54] sm:$0xf]
      %v370 = vld [vmem:[%s3 + $0x58] sm:$0xf]
      %v371 = vld [vmem:[%s3 + $0x5c] sm:$0xf]
      %v372 = vld [vmem:[%s3 + $0x60] sm:$0xf]
      %v373 = vld [vmem:[%s3 + $0x64] sm:$0xf]
      %v374 = vld [vmem:[%s3 + $0x68] sm:$0xf]
      %v375 = vld [vmem:[%s3 + $0x6c] sm:$0xf]
      %v376 = vld [vmem:[%s3 + $0x70] sm:$0xf]
      %v377 = vld [vmem:[%s3 + $0x74] sm:$0xf]
      %v378 = vld [vmem:[%s3 + $0x78] sm:$0xf]
      %v379 = vld [vmem:[%s3 + $0x7c] sm:$0xf]
      %v380 = vld [vmem:[%s4] sm:$0xf]
      %v381 = vld [vmem:[%s4 + $0x4] sm:$0xf]
      %v382 = vld [vmem:[%s4 + $0x8] sm:$0xf]
      %v383 = vld [vmem:[%s4 + $0xc] sm:$0xf]
      %v384 = vld [vmem:[%s4 + $0x10] sm:$0xf]
      %v385 = vld [vmem:[%s4 + $0x14] sm:$0xf]
      %v386 = vld [vmem:[%s4 + $0x18] sm:$0xf]
      %v387 = vld [vmem:[%s4 + $0x1c] sm:$0xf]
      %v388 = vld [vmem:[%s4 + $0x20] sm:$0xf]
      %v389 = vld [vmem:[%s4 + $0x24] sm:$0xf]
      %v390 = vld [vmem:[%s4 + $0x28] sm:$0xf]
      %v391 = vld [vmem:[%s4 + $0x2c] sm:$0xf]
      %v392 = vld [vmem:[%s4 + $0x30] sm:$0xf]
      %v393 = vld [vmem:[%s4 + $0x34] sm:$0xf]
      %v394 = vld [vmem:[%s4 + $0x38] sm:$0xf]
      %v395 = vld [vmem:[%s4 + $0x3c] sm:$0xf]
      %v396 = vld [vmem:[%s288] sm:$0xff]
      %v397 = vld [vmem:[%s288 + $0x8] sm:$0xff]
      %v398 = vld [vmem:[%s288 + $0x10] sm:$0xff]
      %v399 = vld [vmem:[%s288 + $0x18] sm:$0xff]
      %v400 = vld [vmem:[%s288 + $0x20] sm:$0xff]
      %v401 = vld [vmem:[%s288 + $0x28] sm:$0xff]
      %v402 = vld [vmem:[%s288 + $0x30] sm:$0xff]
      %v403 = vld [vmem:[%s288 + $0x38] sm:$0xff]
      %v404 = vld [vmem:[%s288 + $0x40] sm:$0xff]
      %v405 = vld [vmem:[%s288 + $0x48] sm:$0xff]
      %v406 = vld [vmem:[%s288 + $0x50] sm:$0xff]
      %v407 = vld [vmem:[%s288 + $0x58] sm:$0xff]
      %v408 = vld [vmem:[%s288 + $0x60] sm:$0xff]
      %v409 = vld [vmem:[%s288 + $0x68] sm:$0xff]
      %v410 = vld [vmem:[%s288 + $0x70] sm:$0xff]
      %v411 = vld [vmem:[%s288 + $0x78] sm:$0xff]
      %v412 = vld [vmem:[%s288 + $0x80] sm:$0xff]
      %v413 = vld [vmem:[%s288 + $0x88] sm:$0xff]
      %v414 = vld [vmem:[%s288 + $0x90] sm:$0xff]
      %v415 = vld [vmem:[%s288 + $0x98] sm:$0xff]
      %v416 = vld [vmem:[%s288 + $0xa0] sm:$0xff]
      %v417 = vld [vmem:[%s288 + $0xa8] sm:$0xff]
      %v418 = vld [vmem:[%s288 + $0xb0] sm:$0xff]
      %v419 = vld [vmem:[%s288 + $0xb8] sm:$0xff]
      %v420 = vld [vmem:[%s288 + $0xc0] sm:$0xff]
      %v421 = vld [vmem:[%s288 + $0xc8] sm:$0xff]
      %v422 = vld [vmem:[%s288 + $0xd0] sm:$0xff]
      %v423 = vld [vmem:[%s288 + $0xd8] sm:$0xff]
      %v424 = vld [vmem:[%s288 + $0xe0] sm:$0xff]
      %v425 = vld [vmem:[%s288 + $0xe8] sm:$0xff]
      %v426 = vld [vmem:[%s288 + $0xf0] sm:$0xff]
      %v427 = vld [vmem:[%s288 + $0xf8] sm:$0xff]
      %v428 = vpack.c.bf16 %v398, %v396
      %v429 = vpack.c.bf16 %v399, %v397
      %v430 = vpack.c.bf16 %v402, %v400
      %v431 = vpack.c.bf16 %v403, %v401
      %v432 = vpack.c.bf16 %v406, %v404
      %v433 = vpack.c.bf16 %v407, %v405
      %v434 = vpack.c.bf16 %v410, %v408
      %v435 = vpack.c.bf16 %v411, %v409
      %v436 = vpack.c.bf16 %v414, %v412
      %v437 = vpack.c.bf16 %v415, %v413
      %v438 = vpack.c.bf16 %v418, %v416
      %v439 = vpack.c.bf16 %v419, %v417
      %v440 = vpack.c.bf16 %v422, %v420
      %v441 = vpack.c.bf16 %v423, %v421
      %v442 = vpack.c.bf16 %v426, %v424
      %v443 = vpack.c.bf16 %v427, %v425
      %v444 = vld [vmem:[%s293] sm:$0xff]
      %v445 = vld [vmem:[%s293 + $0x8] sm:$0xff]
      %v446 = vld [vmem:[%s293 + $0x10] sm:$0xff]
      %v447 = vld [vmem:[%s293 + $0x18] sm:$0xff]
      %v448 = vld [vmem:[%s293 + $0x20] sm:$0xff]
      %v449 = vld [vmem:[%s293 + $0x28] sm:$0xff]
      %v450 = vld [vmem:[%s293 + $0x30] sm:$0xff]
      %v451 = vld [vmem:[%s293 + $0x38] sm:$0xff]
      %v452 = vld [vmem:[%s293 + $0x40] sm:$0xff]
      %v453 = vld [vmem:[%s293 + $0x48] sm:$0xff]
      %v454 = vld [vmem:[%s293 + $0x50] sm:$0xff]
      %v455 = vld [vmem:[%s293 + $0x58] sm:$0xff]
      %v456 = vld [vmem:[%s293 + $0x60] sm:$0xff]
      %v457 = vld [vmem:[%s293 + $0x68] sm:$0xff]
      %v458 = vld [vmem:[%s293 + $0x70] sm:$0xff]
      %v459 = vld [vmem:[%s293 + $0x78] sm:$0xff]
      %v460 = vld [vmem:[%s293 + $0x80] sm:$0xff]
      %v461 = vld [vmem:[%s293 + $0x88] sm:$0xff]
      %v462 = vld [vmem:[%s293 + $0x90] sm:$0xff]
      %v463 = vld [vmem:[%s293 + $0x98] sm:$0xff]
      %v464 = vld [vmem:[%s293 + $0xa0] sm:$0xff]
      %v465 = vld [vmem:[%s293 + $0xa8] sm:$0xff]
      %v466 = vld [vmem:[%s293 + $0xb0] sm:$0xff]
      %v467 = vld [vmem:[%s293 + $0xb8] sm:$0xff]
      %v468 = vld [vmem:[%s293 + $0xc0] sm:$0xff]
      %v469 = vld [vmem:[%s293 + $0xc8] sm:$0xff]
      %v470 = vld [vmem:[%s293 + $0xd0] sm:$0xff]
      %v471 = vld [vmem:[%s293 + $0xd8] sm:$0xff]
      %v472 = vld [vmem:[%s293 + $0xe0] sm:$0xff]
      %v473 = vld [vmem:[%s293 + $0xe8] sm:$0xff]
      %v474 = vld [vmem:[%s293 + $0xf0] sm:$0xff]
      %v475 = vld [vmem:[%s293 + $0xf8] sm:$0xff]
      %v476 = vpack.c.bf16 %v446, %v444
      %v477 = vpack.c.bf16 %v447, %v445
      %v478 = vpack.c.bf16 %v450, %v448
      %v479 = vpack.c.bf16 %v451, %v449
      %v480 = vpack.c.bf16 %v454, %v452
      %v481 = vpack.c.bf16 %v455, %v453
      %v482 = vpack.c.bf16 %v458, %v456
      %v483 = vpack.c.bf16 %v459, %v457
      %v484 = vpack.c.bf16 %v462, %v460
      %v485 = vpack.c.bf16 %v463, %v461
      %v486 = vpack.c.bf16 %v466, %v464
      %v487 = vpack.c.bf16 %v467, %v465
      %v488 = vpack.c.bf16 %v470, %v468
      %v489 = vpack.c.bf16 %v471, %v469
      %v490 = vpack.c.bf16 %v474, %v472
      %v491 = vpack.c.bf16 %v475, %v473
      %v508 = vunpack.c.l.b16 %v332
      %v509 = vunpack.c.l.b16 %v333
      %v510 = vunpack.c.l.b16 %v334
      %v511 = vunpack.c.l.b16 %v335
      %v512 = vunpack.c.l.b16 %v336
      %v513 = vunpack.c.l.b16 %v337
      %v514 = vunpack.c.l.b16 %v338
      %v515 = vunpack.c.l.b16 %v339
      %v516 = vunpack.c.l.b16 %v340
      %v517 = vunpack.c.l.b16 %v341
      %v518 = vunpack.c.l.b16 %v342
      %v519 = vunpack.c.l.b16 %v343
      %v520 = vunpack.c.l.b16 %v344
      %v521 = vunpack.c.l.b16 %v345
      %v522 = vunpack.c.l.b16 %v346
      %v523 = vunpack.c.l.b16 %v347
      %v524 = vpack.c.b16 %v509, %v508
      %v525 = vpack.c.b16 %v511, %v510
      %v526 = vpack.c.b16 %v513, %v512
      %v527 = vpack.c.b16 %v515, %v514
      %v528 = vpack.c.b16 %v517, %v516
      %v529 = vpack.c.b16 %v519, %v518
      %v530 = vpack.c.b16 %v521, %v520
      %v531 = vpack.c.b16 %v523, %v522
      %540 = vmatprep.subr.bf16.mxu0 %v429
      %541 = vmatpush1.bf16.msra.mxu0 %v428
      %542 = vmatprep.subr.bf16.mxu0 %v431
      %543 = vmatpush1.bf16.msra.mxu0 %v430
      %544 = vmatprep.subr.bf16.mxu0 %v433
      %545 = vmatpush1.bf16.msra.mxu0 %v432
      %546 = vmatprep.subr.bf16.mxu0 %v435
      %547 = vmatpush1.bf16.msra.mxu0 %v434
      %548 = vmatprep.subr.bf16.mxu0 %v437
      %549 = vmatpush1.bf16.msra.mxu0 %v436
      %550 = vmatprep.subr.bf16.mxu0 %v439
      %551 = vmatpush1.bf16.msra.mxu0 %v438
      %552 = vmatprep.subr.bf16.mxu0 %v441
      %553 = vmatpush1.bf16.msra.mxu0 %v440
      %554 = vmatprep.subr.bf16.mxu0 %v443
      %555 = vmatpush1.bf16.msra.mxu0 %v442
      %556 = vmatprep.subr.bf16.mxu0 0
      %557 = vmatpush1.bf16.msra.mxu0 0
      %558 = vmatprep.subr.bf16.mxu0 0
      %559 = vmatpush1.bf16.msra.mxu0 0
      %560 = vmatprep.subr.bf16.mxu0 0
      %561 = vmatpush1.bf16.msra.mxu0 0
      %562 = vmatprep.subr.bf16.mxu0 0
      %563 = vmatpush1.bf16.msra.mxu0 0
      %564 = vmatprep.subr.bf16.mxu0 0
      %565 = vmatpush1.bf16.msra.mxu0 0
      %566 = vmatprep.subr.bf16.mxu0 0
      %567 = vmatpush1.bf16.msra.mxu0 0
      %568 = vmatprep.subr.bf16.mxu0 0
      %569 = vmatpush1.bf16.msra.mxu0 0
      %570 = vmatprep.subr.bf16.mxu0 0
      %571 = vmatpush1.bf16.msra.mxu0 0
      %572 = vmatprep.mubr.bf16.mxu0 0
      %573 = vmatmul.mubr.bf16.gmra.mrb[0].mxu0 %v524
      %v574 = vpop.f32.mrb[0].mxu0
      %v575 = vadd.f32 0.0, %v574
      %v576 = vpop.f32.mrb[0].mxu0
      %v577 = vadd.f32 0.0, %v576
      %v578 = vpop.f32.mrb[0].mxu0
      %v579 = vadd.f32 0.0, %v578
      %v580 = vpop.f32.mrb[0].mxu0
      %v581 = vadd.f32 0.0, %v580
      %582 = vmatprep.mubr.bf16.mxu0 0
      %583 = vmatmul.mubr.bf16.gmra.mrb[0].mxu0 %v525
      %v584 = vpop.f32.mrb[0].mxu0
      %v585 = vadd.f32 0.0, %v584
      %v586 = vpop.f32.mrb[0].mxu0
      %v587 = vadd.f32 0.0, %v586
      %v588 = vpop.f32.mrb[0].mxu0
      %v589 = vadd.f32 0.0, %v588
      %v590 = vpop.f32.mrb[0].mxu0
      %v591 = vadd.f32 0.0, %v590
      %592 = vmatprep.mubr.bf16.mxu0 0
      %593 = vmatmul.mubr.bf16.gmra.mrb[0].mxu0 %v526
      %v594 = vpop.f32.mrb[0].mxu0
      %v595 = vadd.f32 0.0, %v594
      %v596 = vpop.f32.mrb[0].mxu0
      %v597 = vadd.f32 0.0, %v596
      %v598 = vpop.f32.mrb[0].mxu0
      %v599 = vadd.f32 0.0, %v598
      %v600 = vpop.f32.mrb[0].mxu0
      %v601 = vadd.f32 0.0, %v600
      %602 = vmatprep.mubr.bf16.mxu0 0
      %603 = vmatmul.mubr.bf16.gmra.mrb[0].mxu0 %v527
      %v604 = vpop.f32.mrb[0].mxu0
      %v605 = vadd.f32 0.0, %v604
      %v606 = vpop.f32.mrb[0].mxu0
      %v607 = vadd.f32 0.0, %v606
      %v608 = vpop.f32.mrb[0].mxu0
      %v609 = vadd.f32 0.0, %v608
      %v610 = vpop.f32.mrb[0].mxu0
      %v611 = vadd.f32 0.0, %v610
      %612 = vmatprep.mubr.bf16.mxu0 0
      %613 = vmatmul.mubr.bf16.gmra.mrb[0].mxu0 %v528
      %v614 = vpop.f32.mrb[0].mxu0
      %v615 = vadd.f32 0.0, %v614
      %v616 = vpop.f32.mrb[0].mxu0
      %v617 = vadd.f32 0.0, %v616
      %v618 = vpop.f32.mrb[0].mxu0
      %v619 = vadd.f32 0.0, %v618
      %v620 = vpop.f32.mrb[0].mxu0
      %v621 = vadd.f32 0.0, %v620
      %622 = vmatprep.mubr.bf16.mxu0 0
      %623 = vmatmul.mubr.bf16.gmra.mrb[0].mxu0 %v529
      %v624 = vpop.f32.mrb[0].mxu0
      %v625 = vadd.f32 0.0, %v624
      %v626 = vpop.f32.mrb[0].mxu0
      %v627 = vadd.f32 0.0, %v626
      %v628 = vpop.f32.mrb[0].mxu0
      %v629 = vadd.f32 0.0, %v628
      %v630 = vpop.f32.mrb[0].mxu0
      %v631 = vadd.f32 0.0, %v630
      %632 = vmatprep.mubr.bf16.mxu0 0
      %633 = vmatmul.mubr.bf16.gmra.mrb[0].mxu0 %v530
      %v634 = vpop.f32.mrb[0].mxu0
      %v635 = vadd.f32 0.0, %v634
      %v636 = vpop.f32.mrb[0].mxu0
      %v637 = vadd.f32 0.0, %v636
      %v638 = vpop.f32.mrb[0].mxu0
      %v639 = vadd.f32 0.0, %v638
      %v640 = vpop.f32.mrb[0].mxu0
      %v641 = vadd.f32 0.0, %v640
      %642 = vmatprep.mubr.bf16.mxu0 0
      %643 = vmatmul.mubr.bf16.gmra.mrb[0].mxu0 %v531
      %v644 = vpop.f32.mrb[0].mxu0
      %v645 = vadd.f32 0.0, %v644
      %v646 = vpop.f32.mrb[0].mxu0
      %v647 = vadd.f32 0.0, %v646
      %v648 = vpop.f32.mrb[0].mxu0
      %v649 = vadd.f32 0.0, %v648
      %v650 = vpop.f32.mrb[0].mxu0
      %v651 = vadd.f32 0.0, %v650
      %652 = vdwg.mxu0
      %v685 = vunpack.c.l.b16 %v348
      %v686 = vunpack.c.l.b16 %v349
      %v687 = vunpack.c.l.b16 %v350
      %v688 = vunpack.c.l.b16 %v351
      %v689 = vunpack.c.l.b16 %v352
      %v690 = vunpack.c.l.b16 %v353
      %v691 = vunpack.c.l.b16 %v354
      %v692 = vunpack.c.l.b16 %v355
      %v693 = vunpack.c.l.b16 %v356
      %v694 = vunpack.c.l.b16 %v357
      %v695 = vunpack.c.l.b16 %v358
      %v696 = vunpack.c.l.b16 %v359
      %v697 = vunpack.c.l.b16 %v360
      %v698 = vunpack.c.l.b16 %v361
      %v699 = vunpack.c.l.b16 %v362
      %v700 = vunpack.c.l.b16 %v363
      %v701 = vunpack.c.l.b16 %v364
      %v702 = vunpack.c.l.b16 %v365
      %v703 = vunpack.c.l.b16 %v366
      %v704 = vunpack.c.l.b16 %v367
      %v705 = vunpack.c.l.b16 %v368
      %v706 = vunpack.c.l.b16 %v369
      %v707 = vunpack.c.l.b16 %v370
      %v708 = vunpack.c.l.b16 %v371
      %v709 = vunpack.c.l.b16 %v372
      %v710 = vunpack.c.l.b16 %v373
      %v711 = vunpack.c.l.b16 %v374
      %v712 = vunpack.c.l.b16 %v375
      %v713 = vunpack.c.l.b16 %v376
      %v714 = vunpack.c.l.b16 %v377
      %v715 = vunpack.c.l.b16 %v378
      %v716 = vunpack.c.l.b16 %v379
      %v717 = vpack.c.b16 %v686, %v685
      %v718 = vpack.c.b16 %v688, %v687
      %v719 = vpack.c.b16 %v690, %v689
      %v720 = vpack.c.b16 %v692, %v691
      %v721 = vpack.c.b16 %v694, %v693
      %v722 = vpack.c.b16 %v696, %v695
      %v723 = vpack.c.b16 %v698, %v697
      %v724 = vpack.c.b16 %v700, %v699
      %v725 = vpack.c.b16 %v702, %v701
      %v726 = vpack.c.b16 %v704, %v703
      %v727 = vpack.c.b16 %v706, %v705
      %v728 = vpack.c.b16 %v708, %v707
      %v729 = vpack.c.b16 %v710, %v709
      %v730 = vpack.c.b16 %v712, %v711
      %v731 = vpack.c.b16 %v714, %v713
      %v732 = vpack.c.b16 %v716, %v715
      %749 = vmatprep.subr.bf16.mxu0 %v477
      %750 = vmatpush1.bf16.msra.mxu0 %v476
      %751 = vmatprep.subr.bf16.mxu0 %v479
      %752 = vmatpush1.bf16.msra.mxu0 %v478
      %753 = vmatprep.subr.bf16.mxu0 %v481
      %754 = vmatpush1.bf16.msra.mxu0 %v480
      %755 = vmatprep.subr.bf16.mxu0 %v483
      %756 = vmatpush1.bf16.msra.mxu0 %v482
      %757 = vmatprep.subr.bf16.mxu0 %v485
      %758 = vmatpush1.bf16.msra.mxu0 %v484
      %759 = vmatprep.subr.bf16.mxu0 %v487
      %760 = vmatpush1.bf16.msra.mxu0 %v486
      %761 = vmatprep.subr.bf16.mxu0 %v489
      %762 = vmatpush1.bf16.msra.mxu0 %v488
      %763 = vmatprep.subr.bf16.mxu0 %v491
      %764 = vmatpush1.bf16.msra.mxu0 %v490
      %765 = vmatprep.subr.bf16.mxu0 0
      %766 = vmatpush1.bf16.msra.mxu0 0
      %767 = vmatprep.subr.bf16.mxu0 0
      %768 = vmatpush1.bf16.msra.mxu0 0
      %769 = vmatprep.subr.bf16.mxu0 0
      %770 = vmatpush1.bf16.msra.mxu0 0
      %771 = vmatprep.subr.bf16.mxu0 0
      %772 = vmatpush1.bf16.msra.mxu0 0
      %773 = vmatprep.subr.bf16.mxu0 0
      %774 = vmatpush1.bf16.msra.mxu0 0
      %775 = vmatprep.subr.bf16.mxu0 0
      %776 = vmatpush1.bf16.msra.mxu0 0
      %777 = vmatprep.subr.bf16.mxu0 0
      %778 = vmatpush1.bf16.msra.mxu0 0
      %779 = vmatprep.subr.bf16.mxu0 0
      %780 = vmatpush1.bf16.msra.mxu0 0
      %781 = vmatprep.mubr.bf16.mxu0 0
      %782 = vmatmul.mubr.bf16.gmra.mrb[0].mxu0 %v717
      %v783 = vpop.f32.mrb[0].mxu0
      %v784 = vadd.f32 0.0, %v783
      %v785 = vpop.f32.mrb[0].mxu0
      %v786 = vadd.f32 0.0, %v785
      %v787 = vpop.f32.mrb[0].mxu0
      %v788 = vadd.f32 0.0, %v787
      %v789 = vpop.f32.mrb[0].mxu0
      %v790 = vadd.f32 0.0, %v789
      %791 = vmatprep.mubr.bf16.mxu0 0
      %792 = vmatmul.mubr.bf16.gmra.mrb[0].mxu0 %v718
      %v793 = vpop.f32.mrb[0].mxu0
      %v794 = vadd.f32 0.0, %v793
      %v795 = vpop.f32.mrb[0].mxu0
      %v796 = vadd.f32 0.0, %v795
      %v797 = vpop.f32.mrb[0].mxu0
      %v798 = vadd.f32 0.0, %v797
      %v799 = vpop.f32.mrb[0].mxu0
      %v800 = vadd.f32 0.0, %v799
      %801 = vmatprep.mubr.bf16.mxu0 0
      %802 = vmatmul.mubr.bf16.gmra.mrb[0].mxu0 %v719
      %v803 = vpop.f32.mrb[0].mxu0
      %v804 = vadd.f32 0.0, %v803
      %v805 = vpop.f32.mrb[0].mxu0
      %v806 = vadd.f32 0.0, %v805
      %v807 = vpop.f32.mrb[0].mxu0
      %v808 = vadd.f32 0.0, %v807
      %v809 = vpop.f32.mrb[0].mxu0
      %v810 = vadd.f32 0.0, %v809
      %811 = vmatprep.mubr.bf16.mxu0 0
      %812 = vmatmul.mubr.bf16.gmra.mrb[0].mxu0 %v720
      %v813 = vpop.f32.mrb[0].mxu0
      %v814 = vadd.f32 0.0, %v813
      %v815 = vpop.f32.mrb[0].mxu0
      %v816 = vadd.f32 0.0, %v815
      %v817 = vpop.f32.mrb[0].mxu0
      %v818 = vadd.f32 0.0, %v817
      %v819 = vpop.f32.mrb[0].mxu0
      %v820 = vadd.f32 0.0, %v819
      %821 = vmatprep.mubr.bf16.mxu0 0
      %822 = vmatmul.mubr.bf16.gmra.mrb[0].mxu0 %v721
      %v823 = vpop.f32.mrb[0].mxu0
      %v824 = vadd.f32 0.0, %v823
      %v825 = vpop.f32.mrb[0].mxu0
      %v826 = vadd.f32 0.0, %v825
      %v827 = vpop.f32.mrb[0].mxu0
      %v828 = vadd.f32 0.0, %v827
      %v829 = vpop.f32.mrb[0].mxu0
      %v830 = vadd.f32 0.0, %v829
      %831 = vmatprep.mubr.bf16.mxu0 0
      %832 = vmatmul.mubr.bf16.gmra.mrb[0].mxu0 %v722
      %v833 = vpop.f32.mrb[0].mxu0
      %v834 = vadd.f32 0.0, %v833
      %v835 = vpop.f32.mrb[0].mxu0
      %v836 = vadd.f32 0.0, %v835
      %v837 = vpop.f32.mrb[0].mxu0
      %v838 = vadd.f32 0.0, %v837
      %v839 = vpop.f32.mrb[0].mxu0
      %v840 = vadd.f32 0.0, %v839
      %841 = vmatprep.mubr.bf16.mxu0 0
      %842 = vmatmul.mubr.bf16.gmra.mrb[0].mxu0 %v723
      %v843 = vpop.f32.mrb[0].mxu0
      %v844 = vadd.f32 0.0, %v843
      %v845 = vpop.f32.mrb[0].mxu0
      %v846 = vadd.f32 0.0, %v845
      %v847 = vpop.f32.mrb[0].mxu0
      %v848 = vadd.f32 0.0, %v847
      %v849 = vpop.f32.mrb[0].mxu0
      %v850 = vadd.f32 0.0, %v849
      %851 = vmatprep.mubr.bf16.mxu0 0
      %852 = vmatmul.mubr.bf16.gmra.mrb[0].mxu0 %v724
      %v853 = vpop.f32.mrb[0].mxu0
      %v854 = vadd.f32 0.0, %v853
      %v855 = vpop.f32.mrb[0].mxu0
      %v856 = vadd.f32 0.0, %v855
      %v857 = vpop.f32.mrb[0].mxu0
      %v858 = vadd.f32 0.0, %v857
      %v859 = vpop.f32.mrb[0].mxu0
      %v860 = vadd.f32 0.0, %v859
      %861 = vmatprep.mubr.bf16.mxu0 0
      %862 = vmatmul.mubr.bf16.gmra.mrb[0].mxu0 %v725
      %v863 = vpop.f32.mrb[0].mxu0
      %v864 = vadd.f32 0.0, %v863
      %v865 = vpop.f32.mrb[0].mxu0
      %v866 = vadd.f32 0.0, %v865
      %v867 = vpop.f32.mrb[0].mxu0
      %v868 = vadd.f32 0.0, %v867
      %v869 = vpop.f32.mrb[0].mxu0
      %v870 = vadd.f32 0.0, %v869
      %871 = vmatprep.mubr.bf16.mxu0 0
      %872 = vmatmul.mubr.bf16.gmra.mrb[0].mxu0 %v726
      %v873 = vpop.f32.mrb[0].mxu0
      %v874 = vadd.f32 0.0, %v873
      %v875 = vpop.f32.mrb[0].mxu0
      %v876 = vadd.f32 0.0, %v875
      %v877 = vpop.f32.mrb[0].mxu0
      %v878 = vadd.f32 0.0, %v877
      %v879 = vpop.f32.mrb[0].mxu0
      %v880 = vadd.f32 0.0, %v879
      %881 = vmatprep.mubr.bf16.mxu0 0
      %882 = vmatmul.mubr.bf16.gmra.mrb[0].mxu0 %v727
      %v883 = vpop.f32.mrb[0].mxu0
      %v884 = vadd.f32 0.0, %v883
      %v885 = vpop.f32.mrb[0].mxu0
      %v886 = vadd.f32 0.0, %v885
      %v887 = vpop.f32.mrb[0].mxu0
      %v888 = vadd.f32 0.0, %v887
      %v889 = vpop.f32.mrb[0].mxu0
      %v890 = vadd.f32 0.0, %v889
      %891 = vmatprep.mubr.bf16.mxu0 0
      %892 = vmatmul.mubr.bf16.gmra.mrb[0].mxu0 %v728
      %v893 = vpop.f32.mrb[0].mxu0
      %v894 = vadd.f32 0.0, %v893
      %v895 = vpop.f32.mrb[0].mxu0
      %v896 = vadd.f32 0.0, %v895
      %v897 = vpop.f32.mrb[0].mxu0
      %v898 = vadd.f32 0.0, %v897
      %v899 = vpop.f32.mrb[0].mxu0
      %v900 = vadd.f32 0.0, %v899
      %901 = vmatprep.mubr.bf16.mxu0 0
      %902 = vmatmul.mubr.bf16.gmra.mrb[0].mxu0 %v729
      %v903 = vpop.f32.mrb[0].mxu0
      %v904 = vadd.f32 0.0, %v903
      %v905 = vpop.f32.mrb[0].mxu0
      %v906 = vadd.f32 0.0, %v905
      %v907 = vpop.f32.mrb[0].mxu0
      %v908 = vadd.f32 0.0, %v907
      %v909 = vpop.f32.mrb[0].mxu0
      %v910 = vadd.f32 0.0, %v909
      %911 = vmatprep.mubr.bf16.mxu0 0
      %912 = vmatmul.mubr.bf16.gmra.mrb[0].mxu0 %v730
      %v913 = vpop.f32.mrb[0].mxu0
      %v914 = vadd.f32 0.0, %v913
      %v915 = vpop.f32.mrb[0].mxu0
      %v916 = vadd.f32 0.0, %v915
      %v917 = vpop.f32.mrb[0].mxu0
      %v918 = vadd.f32 0.0, %v917
      %v919 = vpop.f32.mrb[0].mxu0
      %v920 = vadd.f32 0.0, %v919
      %921 = vmatprep.mubr.bf16.mxu0 0
      %922 = vmatmul.mubr.bf16.gmra.mrb[0].mxu0 %v731
      %v923 = vpop.f32.mrb[0].mxu0
      %v924 = vadd.f32 0.0, %v923
      %v925 = vpop.f32.mrb[0].mxu0
      %v926 = vadd.f32 0.0, %v925
      %v927 = vpop.f32.mrb[0].mxu0
      %v928 = vadd.f32 0.0, %v927
      %v929 = vpop.f32.mrb[0].mxu0
      %v930 = vadd.f32 0.0, %v929
      %931 = vmatprep.mubr.bf16.mxu0 0
      %932 = vmatmul.mubr.bf16.gmra.mrb[0].mxu0 %v732
      %v933 = vpop.f32.mrb[0].mxu0
      %v934 = vadd.f32 0.0, %v933
      %v935 = vpop.f32.mrb[0].mxu0
      %v936 = vadd.f32 0.0, %v935
      %v937 = vpop.f32.mrb[0].mxu0
      %v938 = vadd.f32 0.0, %v937
      %v939 = vpop.f32.mrb[0].mxu0
      %v940 = vadd.f32 0.0, %v939
      %941 = vdwg.mxu0
      %v942 = vpack.c.bf16 %v868, %v864
      %v943 = vpack.c.bf16 %v870, %v866
      %v944 = vpack.c.bf16 %v878, %v874
      %v945 = vpack.c.bf16 %v880, %v876
      %v946 = vpack.c.bf16 %v888, %v884
      %v947 = vpack.c.bf16 %v890, %v886
      %v948 = vpack.c.bf16 %v898, %v894
      %v949 = vpack.c.bf16 %v900, %v896
      %v950 = vpack.c.bf16 %v908, %v904
      %v951 = vpack.c.bf16 %v910, %v906
      %v952 = vpack.c.bf16 %v918, %v914
      %v953 = vpack.c.bf16 %v920, %v916
      %v954 = vpack.c.bf16 %v928, %v924
      %v955 = vpack.c.bf16 %v930, %v926
      %v956 = vpack.c.bf16 %v938, %v934
      %v957 = vpack.c.bf16 %v940, %v936
      %v958 = vmax.f32 %v784, %v786
      %959 = vmax.xlane.f32.xlu0 %v958
      %v960 = vpop.xlane.xlu0 %959
      %v961 = vmax.f32 %v788, %v790
      %962 = vmax.xlane.f32.xlu0 %v961
      %v963 = vpop.xlane.xlu0 %962
      %v964 = vmax.f32 %v794, %v796
      %965 = vmax.xlane.f32.xlu0 %v964
      %v966 = vpop.xlane.xlu0 %965
      %v967 = vmax.f32 %v798, %v800
      %968 = vmax.xlane.f32.xlu0 %v967
      %v969 = vpop.xlane.xlu0 %968
      %v970 = vmax.f32 %v804, %v806
      %971 = vmax.xlane.f32.xlu0 %v970
      %v972 = vpop.xlane.xlu0 %971
      %v973 = vmax.f32 %v808, %v810
      %974 = vmax.xlane.f32.xlu0 %v973
      %v975 = vpop.xlane.xlu0 %974
      %v976 = vmax.f32 %v814, %v816
      %977 = vmax.xlane.f32.xlu0 %v976
      %v978 = vpop.xlane.xlu0 %977
      %v979 = vmax.f32 %v818, %v820
      %980 = vmax.xlane.f32.xlu0 %v979
      %v981 = vpop.xlane.xlu0 %980
      %v982 = vmax.f32 %v824, %v826
      %983 = vmax.xlane.f32.xlu0 %v982
      %v984 = vpop.xlane.xlu0 %983
      %v985 = vmax.f32 %v828, %v830
      %986 = vmax.xlane.f32.xlu0 %v985
      %v987 = vpop.xlane.xlu0 %986
      %v988 = vmax.f32 %v834, %v836
      %989 = vmax.xlane.f32.xlu0 %v988
      %v990 = vpop.xlane.xlu0 %989
      %v991 = vmax.f32 %v838, %v840
      %992 = vmax.xlane.f32.xlu0 %v991
      %v993 = vpop.xlane.xlu0 %992
      %v994 = vmax.f32 %v844, %v846
      %995 = vmax.xlane.f32.xlu0 %v994
      %v996 = vpop.xlane.xlu0 %995
      %v997 = vmax.f32 %v848, %v850
      %998 = vmax.xlane.f32.xlu0 %v997
      %v999 = vpop.xlane.xlu0 %998
      %v1000 = vmax.f32 %v854, %v856
      %1001 = vmax.xlane.f32.xlu0 %v1000
      %v1002 = vpop.xlane.xlu0 %1001
      %v1003 = vmax.f32 %v858, %v860
      %1004 = vmax.xlane.f32.xlu0 %v1003
      %v1005 = vpop.xlane.xlu0 %1004
      %v1006 = vsub.f32 %v784, %v960
      %v1007 = vsub.f32 %v786, %v960
      %v1008 = vsub.f32 %v788, %v963
      %v1009 = vsub.f32 %v790, %v963
      %v1010 = vsub.f32 %v794, %v966
      %v1011 = vsub.f32 %v796, %v966
      %v1012 = vsub.f32 %v798, %v969
      %v1013 = vsub.f32 %v800, %v969
      %v1014 = vsub.f32 %v804, %v972
      %v1015 = vsub.f32 %v806, %v972
      %v1016 = vsub.f32 %v808, %v975
      %v1017 = vsub.f32 %v810, %v975
      %v1018 = vsub.f32 %v814, %v978
      %v1019 = vsub.f32 %v816, %v978
      %v1020 = vsub.f32 %v818, %v981
      %v1021 = vsub.f32 %v820, %v981
      %v1022 = vsub.f32 %v824, %v984
      %v1023 = vsub.f32 %v826, %v984
      %v1024 = vsub.f32 %v828, %v987
      %v1025 = vsub.f32 %v830, %v987
      %v1026 = vsub.f32 %v834, %v990
      %v1027 = vsub.f32 %v836, %v990
      %v1028 = vsub.f32 %v838, %v993
      %v1029 = vsub.f32 %v840, %v993
      %v1030 = vsub.f32 %v844, %v996
      %v1031 = vsub.f32 %v846, %v996
      %v1032 = vsub.f32 %v848, %v999
      %v1033 = vsub.f32 %v850, %v999
      %v1034 = vsub.f32 %v854, %v1002
      %v1035 = vsub.f32 %v856, %v1002
      %v1036 = vsub.f32 %v858, %v1005
      %v1037 = vsub.f32 %v860, %v1005
      %v1038 = vmul.f32 %v1006, 1.442695
      %v1039 = vpow.pop %v1038
      %v1040 = vmul.f32 %v1007, 1.442695
      %v1041 = vpow.pop %v1040
      %v1042 = vmul.f32 %v1008, 1.442695
      %v1043 = vpow.pop %v1042
      %v1044 = vmul.f32 %v1009, 1.442695
      %v1045 = vpow.pop %v1044
      %v1046 = vmul.f32 %v1010, 1.442695
      %v1047 = vpow.pop %v1046
      %v1048 = vmul.f32 %v1011, 1.442695
      %v1049 = vpow.pop %v1048
      %v1050 = vmul.f32 %v1012, 1.442695
      %v1051 = vpow.pop %v1050
      %v1052 = vmul.f32 %v1013, 1.442695
      %v1053 = vpow.pop %v1052
      %v1054 = vmul.f32 %v1014, 1.442695
      %v1055 = vpow.pop %v1054
      %v1056 = vmul.f32 %v1015, 1.442695
      %v1057 = vpow.pop %v1056
      %v1058 = vmul.f32 %v1016, 1.442695
      %v1059 = vpow.pop %v1058
      %v1060 = vmul.f32 %v1017, 1.442695
      %v1061 = vpow.pop %v1060
      %v1062 = vmul.f32 %v1018, 1.442695
      %v1063 = vpow.pop %v1062
      %v1064 = vmul.f32 %v1019, 1.442695
      %v1065 = vpow.pop %v1064
      %v1066 = vmul.f32 %v1020, 1.442695
      %v1067 = vpow.pop %v1066
      %v1068 = vmul.f32 %v1021, 1.442695
      %v1069 = vpow.pop %v1068
      %v1070 = vmul.f32 %v1022, 1.442695
      %v1071 = vpow.pop %v1070
      %v1072 = vmul.f32 %v1023, 1.442695
      %v1073 = vpow.pop %v1072
      %v1074 = vmul.f32 %v1024, 1.442695
      %v1075 = vpow.pop %v1074
      %v1076 = vmul.f32 %v1025, 1.442695
      %v1077 = vpow.pop %v1076
      %v1078 = vmul.f32 %v1026, 1.442695
      %v1079 = vpow.pop %v1078
      %v1080 = vmul.f32 %v1027, 1.442695
      %v1081 = vpow.pop %v1080
      %v1082 = vmul.f32 %v1028, 1.442695
      %v1083 = vpow.pop %v1082
      %v1084 = vmul.f32 %v1029, 1.442695
      %v1085 = vpow.pop %v1084
      %v1086 = vmul.f32 %v1030, 1.442695
      %v1087 = vpow.pop %v1086
      %v1088 = vmul.f32 %v1031, 1.442695
      %v1089 = vpow.pop %v1088
      %v1090 = vmul.f32 %v1032, 1.442695
      %v1091 = vpow.pop %v1090
      %v1092 = vmul.f32 %v1033, 1.442695
      %v1093 = vpow.pop %v1092
      %v1094 = vmul.f32 %v1034, 1.442695
      %v1095 = vpow.pop %v1094
      %v1096 = vmul.f32 %v1035, 1.442695
      %v1097 = vpow.pop %v1096
      %v1098 = vmul.f32 %v1036, 1.442695
      %v1099 = vpow.pop %v1098
      %v1100 = vmul.f32 %v1037, 1.442695
      %v1101 = vpow.pop %v1100
      %v1102 = vadd.f32 %v1039, %v1041
      %1103 = vadd.xlane.f32.xlu0 %v1102
      %v1104 = vpop.xlane.xlu0 %1103
      %v1105 = vadd.f32 %v1043, %v1045
      %1106 = vadd.xlane.f32.xlu0 %v1105
      %v1107 = vpop.xlane.xlu0 %1106
      %v1108 = vadd.f32 %v1047, %v1049
      %1109 = vadd.xlane.f32.xlu0 %v1108
      %v1110 = vpop.xlane.xlu0 %1109
      %v1111 = vadd.f32 %v1051, %v1053
      %1112 = vadd.xlane.f32.xlu0 %v1111
      %v1113 = vpop.xlane.xlu0 %1112
      %v1114 = vadd.f32 %v1055, %v1057
      %1115 = vadd.xlane.f32.xlu0 %v1114
      %v1116 = vpop.xlane.xlu0 %1115
      %v1117 = vadd.f32 %v1059, %v1061
      %1118 = vadd.xlane.f32.xlu0 %v1117
      %v1119 = vpop.xlane.xlu0 %1118
      %v1120 = vadd.f32 %v1063, %v1065
      %1121 = vadd.xlane.f32.xlu0 %v1120
      %v1122 = vpop.xlane.xlu0 %1121
      %v1123 = vadd.f32 %v1067, %v1069
      %1124 = vadd.xlane.f32.xlu0 %v1123
      %v1125 = vpop.xlane.xlu0 %1124
      %v1126 = vadd.f32 %v1071, %v1073
      %1127 = vadd.xlane.f32.xlu0 %v1126
      %v1128 = vpop.xlane.xlu0 %1127
      %v1129 = vadd.f32 %v1075, %v1077
      %1130 = vadd.xlane.f32.xlu0 %v1129
      %v1131 = vpop.xlane.xlu0 %1130
      %v1132 = vadd.f32 %v1079, %v1081
      %1133 = vadd.xlane.f32.xlu0 %v1132
      %v1134 = vpop.xlane.xlu0 %1133
      %v1135 = vadd.f32 %v1083, %v1085
      %1136 = vadd.xlane.f32.xlu0 %v1135
      %v1137 = vpop.xlane.xlu0 %1136
      %v1138 = vadd.f32 %v1087, %v1089
      %1139 = vadd.xlane.f32.xlu0 %v1138
      %v1140 = vpop.xlane.xlu0 %1139
      %v1141 = vadd.f32 %v1091, %v1093
      %1142 = vadd.xlane.f32.xlu0 %v1141
      %v1143 = vpop.xlane.xlu0 %1142
      %v1144 = vadd.f32 %v1095, %v1097
      %1145 = vadd.xlane.f32.xlu0 %v1144
      %v1146 = vpop.xlane.xlu0 %1145
      %v1147 = vadd.f32 %v1099, %v1101
      %1148 = vadd.xlane.f32.xlu0 %v1147
      %v1149 = vpop.xlane.xlu0 %1148
      %v1150 = vrcp.pop %v1104
      %v1151 = vrcp.pop %v1107
      %v1152 = vrcp.pop %v1110
      %v1153 = vrcp.pop %v1113
      %v1154 = vrcp.pop %v1116
      %v1155 = vrcp.pop %v1119
      %v1156 = vrcp.pop %v1122
      %v1157 = vrcp.pop %v1125
      %v1158 = vrcp.pop %v1128
      %v1159 = vrcp.pop %v1131
      %v1160 = vrcp.pop %v1134
      %v1161 = vrcp.pop %v1137
      %v1162 = vrcp.pop %v1140
      %v1163 = vrcp.pop %v1143
      %v1164 = vrcp.pop %v1146
      %v1165 = vrcp.pop %v1149
      %v1166 = vpack.c.bf16 %v1043, %v1039
      %v1167 = vpack.c.bf16 %v1045, %v1041
      %v1168 = vpack.c.bf16 %v1051, %v1047
      %v1169 = vpack.c.bf16 %v1053, %v1049
      %v1170 = vpack.c.bf16 %v1059, %v1055
      %v1171 = vpack.c.bf16 %v1061, %v1057
      %v1172 = vpack.c.bf16 %v1067, %v1063
      %v1173 = vpack.c.bf16 %v1069, %v1065
      %v1174 = vpack.c.bf16 %v1075, %v1071
      %v1175 = vpack.c.bf16 %v1077, %v1073
      %v1176 = vpack.c.bf16 %v1083, %v1079
      %v1177 = vpack.c.bf16 %v1085, %v1081
      %v1178 = vpack.c.bf16 %v1091, %v1087
      %v1179 = vpack.c.bf16 %v1093, %v1089
      %v1180 = vpack.c.bf16 %v1099, %v1095
      %v1181 = vpack.c.bf16 %v1101, %v1097
      %1182 = vmatprep.subr.bf16.mxu0 %v943
      %1183 = vmatpush1.bf16.xpose.msra.mxu0 %v942
      %1184 = vmatprep.subr.bf16.mxu0 %v945
      %1185 = vmatpush1.bf16.xpose.msra.mxu0 %v944
      %1186 = vmatprep.subr.bf16.mxu0 %v947
      %1187 = vmatpush1.bf16.xpose.msra.mxu0 %v946
      %1188 = vmatprep.subr.bf16.mxu0 %v949
      %1189 = vmatpush1.bf16.xpose.msra.mxu0 %v948
      %1190 = vmatprep.subr.bf16.mxu0 %v951
      %1191 = vmatpush1.bf16.xpose.msra.mxu0 %v950
      %1192 = vmatprep.subr.bf16.mxu0 %v953
      %1193 = vmatpush1.bf16.xpose.msra.mxu0 %v952
      %1194 = vmatprep.subr.bf16.mxu0 %v955
      %1195 = vmatpush1.bf16.xpose.msra.mxu0 %v954
      %1196 = vmatprep.subr.bf16.mxu0 %v957
      %1197 = vmatpush1.bf16.xpose.msra.mxu0 %v956
      %1198 = vmatprep.subr.bf16.mxu0 0
      %1199 = vmatpush1.bf16.xpose.msra.mxu0 0
      %1200 = vmatprep.subr.bf16.mxu0 0
      %1201 = vmatpush1.bf16.xpose.msra.mxu0 0
      %1202 = vmatprep.subr.bf16.mxu0 0
      %1203 = vmatpush1.bf16.xpose.msra.mxu0 0
      %1204 = vmatprep.subr.bf16.mxu0 0
      %1205 = vmatpush1.bf16.xpose.msra.mxu0 0
      %1206 = vmatprep.subr.bf16.mxu0 0
      %1207 = vmatpush1.bf16.xpose.msra.mxu0 0
      %1208 = vmatprep.subr.bf16.mxu0 0
      %1209 = vmatpush1.bf16.xpose.msra.mxu0 0
      %1210 = vmatprep.subr.bf16.mxu0 0
      %1211 = vmatpush1.bf16.xpose.msra.mxu0 0
      %1212 = vmatprep.subr.bf16.mxu0 0
      %1213 = vmatpush1.bf16.xpose.msra.mxu0 0
      %1214 = vmatprep.mubr.bf16.mxu0 %v1167
      %1215 = vmatmul.mubr.bf16.gmra.mrb[0].mxu0 %v1166
      %v1216 = vpop.f32.mrb[0].mxu0
      %v1217 = vadd.f32 0.0, %v1216
      %v1218 = vpop.f32.mrb[0].mxu0
      %v1219 = vpop.f32.mrb[0].mxu0
      %v1220 = vadd.f32 0.0, %v1219
      %v1221 = vpop.f32.mrb[0].mxu0
      %1222 = vmatprep.mubr.bf16.mxu0 %v1169
      %1223 = vmatmul.mubr.bf16.gmra.mrb[0].mxu0 %v1168
      %v1224 = vpop.f32.mrb[0].mxu0
      %v1225 = vadd.f32 0.0, %v1224
      %v1226 = vpop.f32.mrb[0].mxu0
      %v1227 = vpop.f32.mrb[0].mxu0
      %v1228 = vadd.f32 0.0, %v1227
      %v1229 = vpop.f32.mrb[0].mxu0
      %1230 = vmatprep.mubr.bf16.mxu0 %v1171
      %1231 = vmatmul.mubr.bf16.gmra.mrb[0].mxu0 %v1170
      %v1232 = vpop.f32.mrb[0].mxu0
      %v1233 = vadd.f32 0.0, %v1232
      %v1234 = vpop.f32.mrb[0].mxu0
      %v1235 = vpop.f32.mrb[0].mxu0
      %v1236 = vadd.f32 0.0, %v1235
      %v1237 = vpop.f32.mrb[0].mxu0
      %1238 = vmatprep.mubr.bf16.mxu0 %v1173
      %1239 = vmatmul.mubr.bf16.gmra.mrb[0].mxu0 %v1172
      %v1240 = vpop.f32.mrb[0].mxu0
      %v1241 = vadd.f32 0.0, %v1240
      %v1242 = vpop.f32.mrb[0].mxu0
      %v1243 = vpop.f32.mrb[0].mxu0
      %v1244 = vadd.f32 0.0, %v1243
      %v1245 = vpop.f32.mrb[0].mxu0
      %1246 = vmatprep.mubr.bf16.mxu0 %v1175
      %1247 = vmatmul.mubr.bf16.gmra.mrb[0].mxu0 %v1174
      %v1248 = vpop.f32.mrb[0].mxu0
      %v1249 = vadd.f32 0.0, %v1248
      %v1250 = vpop.f32.mrb[0].mxu0
      %v1251 = vpop.f32.mrb[0].mxu0
      %v1252 = vadd.f32 0.0, %v1251
      %v1253 = vpop.f32.mrb[0].mxu0
      %1254 = vmatprep.mubr.bf16.mxu0 %v1177
      %1255 = vmatmul.mubr.bf16.gmra.mrb[0].mxu0 %v1176
      %v1256 = vpop.f32.mrb[0].mxu0
      %v1257 = vadd.f32 0.0, %v1256
      %v1258 = vpop.f32.mrb[0].mxu0
      %v1259 = vpop.f32.mrb[0].mxu0
      %v1260 = vadd.f32 0.0, %v1259
      %v1261 = vpop.f32.mrb[0].mxu0
      %1262 = vmatprep.mubr.bf16.mxu0 %v1179
      %1263 = vmatmul.mubr.bf16.gmra.mrb[0].mxu0 %v1178
      %v1264 = vpop.f32.mrb[0].mxu0
      %v1265 = vadd.f32 0.0, %v1264
      %v1266 = vpop.f32.mrb[0].mxu0
      %v1267 = vpop.f32.mrb[0].mxu0
      %v1268 = vadd.f32 0.0, %v1267
      %v1269 = vpop.f32.mrb[0].mxu0
      %1270 = vmatprep.mubr.bf16.mxu0 %v1181
      %1271 = vmatmul.mubr.bf16.gmra.mrb[0].mxu0 %v1180
      %v1272 = vpop.f32.mrb[0].mxu0
      %v1273 = vadd.f32 0.0, %v1272
      %v1274 = vpop.f32.mrb[0].mxu0
      %v1275 = vpop.f32.mrb[0].mxu0
      %v1276 = vadd.f32 0.0, %v1275
      %v1277 = vpop.f32.mrb[0].mxu0
      %1278 = vdwg.mxu0
      %v1279 = vmul.f32 %v1217, %v300
      %v1280 = vmul.f32 %v1220, %v301
      %v1281 = vmul.f32 %v1225, %v302
      %v1282 = vmul.f32 %v1228, %v303
      %v1283 = vmul.f32 %v1233, %v304
      %v1284 = vmul.f32 %v1236, %v305
      %v1285 = vmul.f32 %v1241, %v306
      %v1286 = vmul.f32 %v1244, %v307
      %v1287 = vmul.f32 %v1249, %v308
      %v1288 = vmul.f32 %v1252, %v309
      %v1289 = vmul.f32 %v1257, %v310
      %v1290 = vmul.f32 %v1260, %v311
      %v1291 = vmul.f32 %v1265, %v312
      %v1292 = vmul.f32 %v1268, %v313
      %v1293 = vmul.f32 %v1273, %v314
      %v1294 = vmul.f32 %v1276, %v315
      %v1295 = vmul.f32 %v1279, %v1150
      %v1296 = vmul.f32 %v1280, %v1151
      %v1297 = vmul.f32 %v1281, %v1152
      %v1298 = vmul.f32 %v1282, %v1153
      %v1299 = vmul.f32 %v1283, %v1154
      %v1300 = vmul.f32 %v1284, %v1155
      %v1301 = vmul.f32 %v1285, %v1156
      %v1302 = vmul.f32 %v1286, %v1157
      %v1303 = vmul.f32 %v1287, %v1158
      %v1304 = vmul.f32 %v1288, %v1159
      %v1305 = vmul.f32 %v1289, %v1160
      %v1306 = vmul.f32 %v1290, %v1161
      %v1307 = vmul.f32 %v1291, %v1162
      %v1308 = vmul.f32 %v1292, %v1163
      %v1309 = vmul.f32 %v1293, %v1164
      %v1310 = vmul.f32 %v1294, %v1165
      %v1311 = vpack.c.bf16 %v1296, %v1295
      %v1312 = vpack.c.bf16 %v1298, %v1297
      %v1313 = vpack.c.bf16 %v1300, %v1299
      %v1314 = vpack.c.bf16 %v1302, %v1301
      %v1315 = vpack.c.bf16 %v1304, %v1303
      %v1316 = vpack.c.bf16 %v1306, %v1305
      %v1317 = vpack.c.bf16 %v1308, %v1307
      %v1318 = vpack.c.bf16 %v1310, %v1309
      %v1319 = vpack.c.bf16 %v579, %v575
      %v1320 = vpack.c.bf16 %v581, %v577
      %v1321 = vpack.c.bf16 %v589, %v585
      %v1322 = vpack.c.bf16 %v591, %v587
      %v1323 = vpack.c.bf16 %v599, %v595
      %v1324 = vpack.c.bf16 %v601, %v597
      %v1325 = vpack.c.bf16 %v609, %v605
      %v1326 = vpack.c.bf16 %v611, %v607
      %v1327 = vpack.c.bf16 %v619, %v615
      %v1328 = vpack.c.bf16 %v621, %v617
      %v1329 = vpack.c.bf16 %v629, %v625
      %v1330 = vpack.c.bf16 %v631, %v627
      %v1331 = vpack.c.bf16 %v639, %v635
      %v1332 = vpack.c.bf16 %v641, %v637
      %v1333 = vpack.c.bf16 %v649, %v645
      %v1334 = vpack.c.bf16 %v651, %v647
      %1335 = vxpose.xlu0.c.b16.start [1/8] %v1311, 128
      %1336 = vxpose.xlu0.c.b16.cont [2/8] %v1312, 128
      %1337 = vxpose.xlu0.c.b16.cont [3/8] %v1313, 128
      %1338 = vxpose.xlu0.c.b16.cont [4/8] %v1314, 128
      %1339 = vxpose.xlu0.c.b16.cont [5/8] %v1315, 128
      %1340 = vxpose.xlu0.c.b16.cont [6/8] %v1316, 128
      %1341 = vxpose.xlu0.c.b16.cont [7/8] %v1317, 128
      %1342 = vxpose.xlu0.c.b16.end [8/8] %v1318, 128
      %v1343 = vpop.trf.xlu0
      %v1344 = vpop.trf.xlu0
      %v1345 = vpop.trf.xlu0
      %v1346 = vpop.trf.xlu0
      %v1347 = vpop.trf.xlu0
      %v1348 = vpop.trf.xlu0
      %v1349 = vpop.trf.xlu0
      %v1350 = vpop.trf.xlu0
      %1351 = vmatprep.subr.bf16.mxu0 %v1320
      %1352 = vmatpush1.bf16.msra.mxu0 %v1319
      %1353 = vmatprep.subr.bf16.mxu0 %v1322
      %1354 = vmatpush1.bf16.msra.mxu0 %v1321
      %1355 = vmatprep.subr.bf16.mxu0 %v1324
      %1356 = vmatpush1.bf16.msra.mxu0 %v1323
      %1357 = vmatprep.subr.bf16.mxu0 %v1326
      %1358 = vmatpush1.bf16.msra.mxu0 %v1325
      %1359 = vmatprep.subr.bf16.mxu0 %v1328
      %1360 = vmatpush1.bf16.msra.mxu0 %v1327
      %1361 = vmatprep.subr.bf16.mxu0 %v1330
      %1362 = vmatpush1.bf16.msra.mxu0 %v1329
      %1363 = vmatprep.subr.bf16.mxu0 %v1332
      %1364 = vmatpush1.bf16.msra.mxu0 %v1331
      %1365 = vmatprep.subr.bf16.mxu0 %v1334
      %1366 = vmatpush1.bf16.msra.mxu0 %v1333
      %1367 = vmatprep.subr.bf16.mxu0 0
      %1368 = vmatpush1.bf16.msra.mxu0 0
      %1369 = vmatprep.subr.bf16.mxu0 0
      %1370 = vmatpush1.bf16.msra.mxu0 0
      %1371 = vmatprep.subr.bf16.mxu0 0
      %1372 = vmatpush1.bf16.msra.mxu0 0
      %1373 = vmatprep.subr.bf16.mxu0 0
      %1374 = vmatpush1.bf16.msra.mxu0 0
      %1375 = vmatprep.subr.bf16.mxu0 0
      %1376 = vmatpush1.bf16.msra.mxu0 0
      %1377 = vmatprep.subr.bf16.mxu0 0
      %1378 = vmatpush1.bf16.msra.mxu0 0
      %1379 = vmatprep.subr.bf16.mxu0 0
      %1380 = vmatpush1.bf16.msra.mxu0 0
      %1381 = vmatprep.subr.bf16.mxu0 0
      %1382 = vmatpush1.bf16.msra.mxu0 0
      %1383 = vmatprep.mubr.bf16.mxu0 0
      %1384 = vmatmul.mubr.bf16.gmra.mrb[0].mxu0 %v1343
      %v1385 = vpop.f32.mrb[0].mxu0
      %v1386 = vadd.f32 0.0, %v1385
      %v1387 = vpop.f32.mrb[0].mxu0
      %v1388 = vadd.f32 0.0, %v1387
      %v1389 = vpop.f32.mrb[0].mxu0
      %v1390 = vadd.f32 0.0, %v1389
      %v1391 = vpop.f32.mrb[0].mxu0
      %v1392 = vadd.f32 0.0, %v1391
      %1393 = vmatprep.mubr.bf16.mxu0 0
      %1394 = vmatmul.mubr.bf16.gmra.mrb[0].mxu0 %v1344
      %v1395 = vpop.f32.mrb[0].mxu0
      %v1396 = vadd.f32 0.0, %v1395
      %v1397 = vpop.f32.mrb[0].mxu0
      %v1398 = vadd.f32 0.0, %v1397
      %v1399 = vpop.f32.mrb[0].mxu0
      %v1400 = vadd.f32 0.0, %v1399
      %v1401 = vpop.f32.mrb[0].mxu0
      %v1402 = vadd.f32 0.0, %v1401
      %1403 = vmatprep.mubr.bf16.mxu0 0
      %1404 = vmatmul.mubr.bf16.gmra.mrb[0].mxu0 %v1345
      %v1405 = vpop.f32.mrb[0].mxu0
      %v1406 = vadd.f32 0.0, %v1405
      %v1407 = vpop.f32.mrb[0].mxu0
      %v1408 = vadd.f32 0.0, %v1407
      %v1409 = vpop.f32.mrb[0].mxu0
      %v1410 = vadd.f32 0.0, %v1409
      %v1411 = vpop.f32.mrb[0].mxu0
      %v1412 = vadd.f32 0.0, %v1411
      %1413 = vmatprep.mubr.bf16.mxu0 0
      %1414 = vmatmul.mubr.bf16.gmra.mrb[0].mxu0 %v1346
      %v1415 = vpop.f32.mrb[0].mxu0
      %v1416 = vadd.f32 0.0, %v1415
      %v1417 = vpop.f32.mrb[0].mxu0
      %v1418 = vadd.f32 0.0, %v1417
      %v1419 = vpop.f32.mrb[0].mxu0
      %v1420 = vadd.f32 0.0, %v1419
      %v1421 = vpop.f32.mrb[0].mxu0
      %v1422 = vadd.f32 0.0, %v1421
      %1423 = vmatprep.mubr.bf16.mxu0 0
      %1424 = vmatmul.mubr.bf16.gmra.mrb[0].mxu0 %v1347
      %v1425 = vpop.f32.mrb[0].mxu0
      %v1426 = vadd.f32 0.0, %v1425
      %v1427 = vpop.f32.mrb[0].mxu0
      %v1428 = vadd.f32 0.0, %v1427
      %v1429 = vpop.f32.mrb[0].mxu0
      %v1430 = vadd.f32 0.0, %v1429
      %v1431 = vpop.f32.mrb[0].mxu0
      %v1432 = vadd.f32 0.0, %v1431
      %1433 = vmatprep.mubr.bf16.mxu0 0
      %1434 = vmatmul.mubr.bf16.gmra.mrb[0].mxu0 %v1348
      %v1435 = vpop.f32.mrb[0].mxu0
      %v1436 = vadd.f32 0.0, %v1435
      %v1437 = vpop.f32.mrb[0].mxu0
      %v1438 = vadd.f32 0.0, %v1437
      %v1439 = vpop.f32.mrb[0].mxu0
      %v1440 = vadd.f32 0.0, %v1439
      %v1441 = vpop.f32.mrb[0].mxu0
      %v1442 = vadd.f32 0.0, %v1441
      %1443 = vmatprep.mubr.bf16.mxu0 0
      %1444 = vmatmul.mubr.bf16.gmra.mrb[0].mxu0 %v1349
      %v1445 = vpop.f32.mrb[0].mxu0
      %v1446 = vadd.f32 0.0, %v1445
      %v1447 = vpop.f32.mrb[0].mxu0
      %v1448 = vadd.f32 0.0, %v1447
      %v1449 = vpop.f32.mrb[0].mxu0
      %v1450 = vadd.f32 0.0, %v1449
      %v1451 = vpop.f32.mrb[0].mxu0
      %v1452 = vadd.f32 0.0, %v1451
      %1453 = vmatprep.mubr.bf16.mxu0 0
      %1454 = vmatmul.mubr.bf16.gmra.mrb[0].mxu0 %v1350
      %v1455 = vpop.f32.mrb[0].mxu0
      %v1456 = vadd.f32 0.0, %v1455
      %v1457 = vpop.f32.mrb[0].mxu0
      %v1458 = vadd.f32 0.0, %v1457
      %v1459 = vpop.f32.mrb[0].mxu0
      %v1460 = vadd.f32 0.0, %v1459
      %v1461 = vpop.f32.mrb[0].mxu0
      %v1462 = vadd.f32 0.0, %v1461
      %1463 = vdwg.mxu0
      %v1464 = vpack.c.bf16 %v1390, %v1386
      %v1465 = vpack.c.bf16 %v1392, %v1388
      %v1466 = vpack.c.bf16 %v1400, %v1396
      %v1467 = vpack.c.bf16 %v1402, %v1398
      %v1468 = vpack.c.bf16 %v1410, %v1406
      %v1469 = vpack.c.bf16 %v1412, %v1408
      %v1470 = vpack.c.bf16 %v1420, %v1416
      %v1471 = vpack.c.bf16 %v1422, %v1418
      %v1472 = vpack.c.bf16 %v1430, %v1426
      %v1473 = vpack.c.bf16 %v1432, %v1428
      %v1474 = vpack.c.bf16 %v1440, %v1436
      %v1475 = vpack.c.bf16 %v1442, %v1438
      %v1476 = vpack.c.bf16 %v1450, %v1446
      %v1477 = vpack.c.bf16 %v1452, %v1448
      %v1478 = vpack.c.bf16 %v1460, %v1456
      %v1479 = vpack.c.bf16 %v1462, %v1458
      %1481 = vset.pattern.permute.xlu0 0
      %1482 = vperm.xlu0 %1481, %v316
      %v1483 = vpop.permute.xlu0 %1482
      %1486 = vset.pattern.permute.xlu0 0
      %1487 = vperm.xlu0 %1486, %v317
      %v1488 = vpop.permute.xlu0 %1487
      %1491 = vset.pattern.permute.xlu0 0
      %1492 = vperm.xlu0 %1491, %v318
      %v1493 = vpop.permute.xlu0 %1492
      %1496 = vset.pattern.permute.xlu0 0
      %1497 = vperm.xlu0 %1496, %v319
      %v1498 = vpop.permute.xlu0 %1497
      %1501 = vset.pattern.permute.xlu0 0
      %1502 = vperm.xlu0 %1501, %v320
      %v1503 = vpop.permute.xlu0 %1502
      %1506 = vset.pattern.permute.xlu0 0
      %1507 = vperm.xlu0 %1506, %v321
      %v1508 = vpop.permute.xlu0 %1507
      %1511 = vset.pattern.permute.xlu0 0
      %1512 = vperm.xlu0 %1511, %v322
      %v1513 = vpop.permute.xlu0 %1512
      %1516 = vset.pattern.permute.xlu0 0
      %1517 = vperm.xlu0 %1516, %v323
      %v1518 = vpop.permute.xlu0 %1517
      %1521 = vset.pattern.permute.xlu0 0
      %1522 = vperm.xlu0 %1521, %v324
      %v1523 = vpop.permute.xlu0 %1522
      %1526 = vset.pattern.permute.xlu0 0
      %1527 = vperm.xlu0 %1526, %v325
      %v1528 = vpop.permute.xlu0 %1527
      %1531 = vset.pattern.permute.xlu0 0
      %1532 = vperm.xlu0 %1531, %v326
      %v1533 = vpop.permute.xlu0 %1532
      %1536 = vset.pattern.permute.xlu0 0
      %1537 = vperm.xlu0 %1536, %v327
      %v1538 = vpop.permute.xlu0 %1537
      %1541 = vset.pattern.permute.xlu0 0
      %1542 = vperm.xlu0 %1541, %v328
      %v1543 = vpop.permute.xlu0 %1542
      %1546 = vset.pattern.permute.xlu0 0
      %1547 = vperm.xlu0 %1546, %v329
      %v1548 = vpop.permute.xlu0 %1547
      %1551 = vset.pattern.permute.xlu0 0
      %1552 = vperm.xlu0 %1551, %v330
      %v1553 = vpop.permute.xlu0 %1552
      %1556 = vset.pattern.permute.xlu0 0
      %1557 = vperm.xlu0 %1556, %v331
      %v1558 = vpop.permute.xlu0 %1557
      %v1576 = vunpack.c.l.b16 %v380
      %v1577 = vunpack.c.l.b16 %v381
      %v1578 = vunpack.c.l.b16 %v382
      %v1579 = vunpack.c.l.b16 %v383
      %v1580 = vunpack.c.l.b16 %v384
      %v1581 = vunpack.c.l.b16 %v385
      %v1582 = vunpack.c.l.b16 %v386
      %v1583 = vunpack.c.l.b16 %v387
      %v1584 = vunpack.c.l.b16 %v388
      %v1585 = vunpack.c.l.b16 %v389
      %v1586 = vunpack.c.l.b16 %v390
      %v1587 = vunpack.c.l.b16 %v391
      %v1588 = vunpack.c.l.b16 %v392
      %v1589 = vunpack.c.l.b16 %v393
      %v1590 = vunpack.c.l.b16 %v394
      %v1591 = vunpack.c.l.b16 %v395
      %v1592 = vpack.c.b16 %v1577, %v1576
      %v1593 = vpack.c.b16 %v1579, %v1578
      %v1594 = vpack.c.b16 %v1581, %v1580
      %v1595 = vpack.c.b16 %v1583, %v1582
      %v1596 = vpack.c.b16 %v1585, %v1584
      %v1597 = vpack.c.b16 %v1587, %v1586
      %v1598 = vpack.c.b16 %v1589, %v1588
      %v1599 = vpack.c.b16 %v1591, %v1590
      %1608 = vmatprep.subr.bf16.mxu0 %v1465
      %1609 = vmatpush1.bf16.msra.mxu0 %v1464
      %1610 = vmatprep.subr.bf16.mxu0 %v1467
      %1611 = vmatpush1.bf16.msra.mxu0 %v1466
      %1612 = vmatprep.subr.bf16.mxu0 %v1469
      %1613 = vmatpush1.bf16.msra.mxu0 %v1468
      %1614 = vmatprep.subr.bf16.mxu0 %v1471
      %1615 = vmatpush1.bf16.msra.mxu0 %v1470
      %1616 = vmatprep.subr.bf16.mxu0 %v1473
      %1617 = vmatpush1.bf16.msra.mxu0 %v1472
      %1618 = vmatprep.subr.bf16.mxu0 %v1475
      %1619 = vmatpush1.bf16.msra.mxu0 %v1474
      %1620 = vmatprep.subr.bf16.mxu0 %v1477
      %1621 = vmatpush1.bf16.msra.mxu0 %v1476
      %1622 = vmatprep.subr.bf16.mxu0 %v1479
      %1623 = vmatpush1.bf16.msra.mxu0 %v1478
      %1624 = vmatprep.subr.bf16.mxu0 0
      %1625 = vmatpush1.bf16.msra.mxu0 0
      %1626 = vmatprep.subr.bf16.mxu0 0
      %1627 = vmatpush1.bf16.msra.mxu0 0
      %1628 = vmatprep.subr.bf16.mxu0 0
      %1629 = vmatpush1.bf16.msra.mxu0 0
      %1630 = vmatprep.subr.bf16.mxu0 0
      %1631 = vmatpush1.bf16.msra.mxu0 0
      %1632 = vmatprep.subr.bf16.mxu0 0
      %1633 = vmatpush1.bf16.msra.mxu0 0
      %1634 = vmatprep.subr.bf16.mxu0 0
      %1635 = vmatpush1.bf16.msra.mxu0 0
      %1636 = vmatprep.subr.bf16.mxu0 0
      %1637 = vmatpush1.bf16.msra.mxu0 0
      %1638 = vmatprep.subr.bf16.mxu0 0
      %1639 = vmatpush1.bf16.msra.mxu0 0
      %1640 = vmatprep.mubr.bf16.mxu0 0
      %1641 = vmatmul.mubr.bf16.gmra.mrb[0].mxu0 %v1592
      %v1642 = vpop.f32.mrb[0].mxu0
      %v1643 = vadd.f32 %v1483, %v1642
      %v1644 = vpop.f32.mrb[0].mxu0
      %v1645 = vadd.f32 %v1483, %v1644
      %v1646 = vpop.f32.mrb[0].mxu0
      %v1647 = vadd.f32 %v1488, %v1646
      %v1648 = vpop.f32.mrb[0].mxu0
      %v1649 = vadd.f32 %v1488, %v1648
      %1650 = vmatprep.mubr.bf16.mxu0 0
      %1651 = vmatmul.mubr.bf16.gmra.mrb[0].mxu0 %v1593
      %v1652 = vpop.f32.mrb[0].mxu0
      %v1653 = vadd.f32 %v1493, %v1652
      %v1654 = vpop.f32.mrb[0].mxu0
      %v1655 = vadd.f32 %v1493, %v1654
      %v1656 = vpop.f32.mrb[0].mxu0
      %v1657 = vadd.f32 %v1498, %v1656
      %v1658 = vpop.f32.mrb[0].mxu0
      %v1659 = vadd.f32 %v1498, %v1658
      %1660 = vmatprep.mubr.bf16.mxu0 0
      %1661 = vmatmul.mubr.bf16.gmra.mrb[0].mxu0 %v1594
      %v1662 = vpop.f32.mrb[0].mxu0
      %v1663 = vadd.f32 %v1503, %v1662
      %v1664 = vpop.f32.mrb[0].mxu0
      %v1665 = vadd.f32 %v1503, %v1664
      %v1666 = vpop.f32.mrb[0].mxu0
      %v1667 = vadd.f32 %v1508, %v1666
      %v1668 = vpop.f32.mrb[0].mxu0
      %v1669 = vadd.f32 %v1508, %v1668
      %1670 = vmatprep.mubr.bf16.mxu0 0
      %1671 = vmatmul.mubr.bf16.gmra.mrb[0].mxu0 %v1595
      %v1672 = vpop.f32.mrb[0].mxu0
      %v1673 = vadd.f32 %v1513, %v1672
      %v1674 = vpop.f32.mrb[0].mxu0
      %v1675 = vadd.f32 %v1513, %v1674
      %v1676 = vpop.f32.mrb[0].mxu0
      %v1677 = vadd.f32 %v1518, %v1676
      %v1678 = vpop.f32.mrb[0].mxu0
      %v1679 = vadd.f32 %v1518, %v1678
      %1680 = vmatprep.mubr.bf16.mxu0 0
      %1681 = vmatmul.mubr.bf16.gmra.mrb[0].mxu0 %v1596
      %v1682 = vpop.f32.mrb[0].mxu0
      %v1683 = vadd.f32 %v1523, %v1682
      %v1684 = vpop.f32.mrb[0].mxu0
      %v1685 = vadd.f32 %v1523, %v1684
      %v1686 = vpop.f32.mrb[0].mxu0
      %v1687 = vadd.f32 %v1528, %v1686
      %v1688 = vpop.f32.mrb[0].mxu0
      %v1689 = vadd.f32 %v1528, %v1688
      %1690 = vmatprep.mubr.bf16.mxu0 0
      %1691 = vmatmul.mubr.bf16.gmra.mrb[0].mxu0 %v1597
      %v1692 = vpop.f32.mrb[0].mxu0
      %v1693 = vadd.f32 %v1533, %v1692
      %v1694 = vpop.f32.mrb[0].mxu0
      %v1695 = vadd.f32 %v1533, %v1694
      %v1696 = vpop.f32.mrb[0].mxu0
      %v1697 = vadd.f32 %v1538, %v1696
      %v1698 = vpop.f32.mrb[0].mxu0
      %v1699 = vadd.f32 %v1538, %v1698
      %1700 = vmatprep.mubr.bf16.mxu0 0
      %1701 = vmatmul.mubr.bf16.gmra.mrb[0].mxu0 %v1598
      %v1702 = vpop.f32.mrb[0].mxu0
      %v1703 = vadd.f32 %v1543, %v1702
      %v1704 = vpop.f32.mrb[0].mxu0
      %v1705 = vadd.f32 %v1543, %v1704
      %v1706 = vpop.f32.mrb[0].mxu0
      %v1707 = vadd.f32 %v1548, %v1706
      %v1708 = vpop.f32.mrb[0].mxu0
      %v1709 = vadd.f32 %v1548, %v1708
      %1710 = vmatprep.mubr.bf16.mxu0 0
      %1711 = vmatmul.mubr.bf16.gmra.mrb[0].mxu0 %v1599
      %v1712 = vpop.f32.mrb[0].mxu0
      %v1713 = vadd.f32 %v1553, %v1712
      %v1714 = vpop.f32.mrb[0].mxu0
      %v1715 = vadd.f32 %v1553, %v1714
      %v1716 = vpop.f32.mrb[0].mxu0
      %v1717 = vadd.f32 %v1558, %v1716
      %v1718 = vpop.f32.mrb[0].mxu0
      %v1719 = vadd.f32 %v1558, %v1718
      %1720 = vdwg.mxu0
      %1721 = vst [vmem:[%s298] sm:$0xff] %v1643
      %1722 = vst [vmem:[%s298 + $0x8] sm:$0xff] %v1645
      %1723 = vst [vmem:[%s298 + $0x10] sm:$0xff] %v1647
      %1724 = vst [vmem:[%s298 + $0x18] sm:$0xff] %v1649
      %1725 = vst [vmem:[%s298 + $0x20] sm:$0xff] %v1653
      %1726 = vst [vmem:[%s298 + $0x28] sm:$0xff] %v1655
      %1727 = vst [vmem:[%s298 + $0x30] sm:$0xff] %v1657
      %1728 = vst [vmem:[%s298 + $0x38] sm:$0xff] %v1659
      %1729 = vst [vmem:[%s298 + $0x40] sm:$0xff] %v1663
      %1730 = vst [vmem:[%s298 + $0x48] sm:$0xff] %v1665
      %1731 = vst [vmem:[%s298 + $0x50] sm:$0xff] %v1667
      %1732 = vst [vmem:[%s298 + $0x58] sm:$0xff] %v1669
      %1733 = vst [vmem:[%s298 + $0x60] sm:$0xff] %v1673
      %1734 = vst [vmem:[%s298 + $0x68] sm:$0xff] %v1675
      %1735 = vst [vmem:[%s298 + $0x70] sm:$0xff] %v1677
      %1736 = vst [vmem:[%s298 + $0x78] sm:$0xff] %v1679
      %1737 = vst [vmem:[%s298 + $0x80] sm:$0xff] %v1683
      %1738 = vst [vmem:[%s298 + $0x88] sm:$0xff] %v1685
      %1739 = vst [vmem:[%s298 + $0x90] sm:$0xff] %v1687
      %1740 = vst [vmem:[%s298 + $0x98] sm:$0xff] %v1689
      %1741 = vst [vmem:[%s298 + $0xa0] sm:$0xff] %v1693
      %1742 = vst [vmem:[%s298 + $0xa8] sm:$0xff] %v1695
      %1743 = vst [vmem:[%s298 + $0xb0] sm:$0xff] %v1697
      %1744 = vst [vmem:[%s298 + $0xb8] sm:$0xff] %v1699
      %1745 = vst [vmem:[%s298 + $0xc0] sm:$0xff] %v1703
      %1746 = vst [vmem:[%s298 + $0xc8] sm:$0xff] %v1705
      %1747 = vst [vmem:[%s298 + $0xd0] sm:$0xff] %v1707
      %1748 = vst [vmem:[%s298 + $0xd8] sm:$0xff] %v1709
      %1749 = vst [vmem:[%s298 + $0xe0] sm:$0xff] %v1713
      %1750 = vst [vmem:[%s298 + $0xe8] sm:$0xff] %v1715
      %1751 = vst [vmem:[%s298 + $0xf0] sm:$0xff] %v1717
      %1752 = vst [vmem:[%s298 + $0xf8] sm:$0xff] %v1719
      %p1753 = scmp.lt.s32.totalorder %s18, 1
      %s1754 = scalar_select %p1753, %s18, 1
      %s1755 = smul.addr %s1754, 32
      %s1756 = smul.addr %s1755, 8
      %s1757 = scalar_lea.vmem %s7, %s1756
      // Predicated region
      $region49: #{linear_cross_attention.1} parent=47 // pred_check
        %p1758 = pneg %p193
      $region50: #{linear_cross_attention.1} parent=47 // pred_check_branch
        %1760 = sbr.rel (%p1758) target = $region52
      $region51: #{linear_cross_attention.1} parent=47 // pred_region
        _
      $region52: #{linear_cross_attention.1} parent=47 // pred_fallthru
        _
    $region48: #{linear_cross_attention.1} parent=5 // pred_fallthru
      _
    %p1761 = scmp.le.s32.totalorder 2, %s13
    // Predicated region
    $region53: #{linear_cross_attention.1} parent=5 // pred_check
      %p1762 = pneg %p1761
    $region54: #{linear_cross_attention.1} parent=5 // pred_check_branch
      %1764 = sbr.rel (%p1762) target = $region56
    $region55: #{linear_cross_attention.1} parent=5 // pred_region
      %s1765 = ssub.s32 %s13, 2
      // Predicated region
      $region57: #{linear_cross_attention.1} parent=55 // pred_check
        %p1766 = pneg %p199
      $region58: #{linear_cross_attention.1} parent=55 // pred_check_branch
        %1768 = sbr.rel (%p1766) target = $region60
      $region59: #{linear_cross_attention.1} parent=55 // pred_region
        %p1769 = scmp.lt.s32.totalorder %s19, 1
        %s1770 = scalar_select %p1769, %s19, 1
        %s1771 = smul.addr %s1770, 32
        %s1772 = smul.addr %s1771, 8
        %s1773 = scalar_lea.vmem %s7, %s1772
      $region60: #{linear_cross_attention.1} parent=55 // pred_fallthru
        _
    $region56: #{linear_cross_attention.1} parent=5 // pred_fallthru
      _
  $region6: #{linear_cross_attention.1} parent=0 // loop_footer
    %s17 = sadd.s32 1, %s13
  $region7: #{linear_cross_attention.1} parent=0 // loop_footer_branch
    %12 = sbr.rel target = $region3
  $region8: #{linear_cross_attention.1} parent=0 // loop_exit
    _

</llo_original>
